<compile_context>
chip_gen: v6e
topology: v6e:2x2x1
jax: 0.10.0
libtpu: 0.0.40
codegen_flags: <defaults>
</compile_context>

<pallas_src>
import functools

import jax
import jax.numpy as jnp
from jax.experimental import pallas as pl
from jax.experimental.pallas import tpu as pltpu


def _fire_kernel(x_ref, wsq_ref, bsq_ref, wcat_ref, bcat_ref, w3p_ref,
                 out_ref, s_pad_ref, *, W):
    # x_ref    : (1, H*W, Cin)   bf16  full image, resident across row tiles
    # wsq_ref  : (Cin, Csq)      bf16
    # bsq_ref  : (1, Csq)        f32
    # wcat_ref : (Csq, Cout)     bf16  [expand1x1 | center tap of expand3x3]
    # bcat_ref : (1, Cout)       f32   [b1 | b3]
    # w3p_ref  : (8, Csq, Cout)  bf16  8 non-center taps, zero cols [:Ce1]
    # out_ref  : (1, TH*W, Cout) out dtype, one row tile
    # s_pad_ref: ((H+2)*W, Csq)  bf16  squeeze act + 1 zero halo row top/bottom
    t = pl.program_id(1)
    HW = x_ref.shape[1]
    Csq = wsq_ref.shape[1]
    THW = out_ref.shape[1]

    # ---- squeeze 1x1 + ReLU once per image, into the zero-halo'd scratch
    #      (bias/ReLU in f32, stored bf16 for the MXU) ----
    @pl.when(t == 0)
    def _():
        s = jnp.dot(x_ref[0], wsq_ref[...], preferred_element_type=jnp.float32)
        s = jnp.maximum(s + bsq_ref[...], 0.0)
        s_pad_ref[pl.ds(0, W), :] = jnp.zeros((W, Csq), jnp.bfloat16)
        s_pad_ref[pl.ds(W, HW), :] = s.astype(jnp.bfloat16)
        s_pad_ref[pl.ds(W + HW, W), :] = jnp.zeros((W, Csq), jnp.bfloat16)

    # ---- halo'd (TH+2)-row window of the squeeze activation (bf16) ----
    start = pl.multiple_of(t * THW, THW)
    win = s_pad_ref[pl.ds(start, THW + 2 * W), :]

    # Two pre-masked copies handle the image column borders for all six
    # dx != 0 taps (2 selects instead of 6): a dx=+1 flat shift wraps into
    # source column 0, a dx=-1 shift into source column W-1 -> zero at source.
    wcol = jax.lax.broadcasted_iota(jnp.int32, win.shape, 0) % W
    zeros_win = jnp.zeros_like(win)
    win_r = jnp.where(wcol == 0, zeros_win, win)       # used by dx = +1 taps
    win_l = jnp.where(wcol == W - 1, zeros_win, win)   # used by dx = -1 taps

    # ---- expand1x1 fused with the 3x3 center tap: one wide matmul whose
    #      output is already channel-concatenated ----
    center = win[W:W + THW, :]
    acc = jnp.dot(center, wcat_ref[...], preferred_element_type=jnp.float32)
    acc = acc + bcat_ref[...]                            # (THW, Cout) f32

    # ---- remaining 8 taps of expand3x3: static slices of the pre-masked
    #      bf16 window + 8 accumulate matmuls (no lane concat, no relayout;
    #      zero-padded tap weights keep every dot full output width) ----
    zero_row = jnp.zeros((1, Csq), jnp.bfloat16)
    k = 0
    for dy in (-1, 0, 1):
        for dx in (-1, 0, 1):
            if dy == 0 and dx == 0:
                continue
            src = win_l if dx == -1 else (win_r if dx == 1 else win)
            base = src[(1 + dy) * W:(1 + dy) * W + THW, :]
            if dx == 1:
                tap = jnp.concatenate([base[1:, :], zero_row], axis=0)
            elif dx == -1:
                tap = jnp.concatenate([zero_row, base[:-1, :]], axis=0)
            else:
                tap = base
            acc = acc + jnp.dot(tap, w3p_ref[k],
                                preferred_element_type=jnp.float32)
            k += 1

    # ---- ReLU + one full-width (lane-dense) store ----
    out_ref[0] = jnp.maximum(acc, 0.0).astype(out_ref.dtype)


def fire_forward_nhwc(x_nhwc, params, *, row_tile=None, out_dtype=jnp.float32):
    """Core entry point: (N, H, W, Cin) -> (N, H, W, Ce1+Ce3), channels last."""
    wsq, bsq, w1, b1, w3, b3 = params
    N, H, W, Cin = x_nhwc.shape
    Csq = wsq.shape[1]
    Ce1 = w1.shape[1]
    Ce3 = w3.shape[2]
    Cout = Ce1 + Ce3
    HW = H * W

    # bf16 vreg sublane tile is 16: W % 16 == 0 keeps the (H,W,C)->(H*W,C)
    # flatten and the flat shift-based im2col layout no-ops.
    assert W % 16 == 0, "pad W to a multiple of 16 before calling fire_forward"

    if row_tile is None:
        row_tile = H                     # one tile per image by default
    assert H % row_tile == 0, "row_tile must divide H"
    T = H // row_tile
    THW = row_tile * W

    x_flat = x_nhwc.reshape(N, HW, Cin).astype(jnp.bfloat16)

    # Weight prep (bf16 operands, f32 biases):
    #   wcat = [expand1x1 | center tap of expand3x3]      -> (Csq, Cout)
    #   w3p  = 8 non-center 3x3 taps, zero-padded to Cout  -> (8, Csq, Cout)
    wsq_bf = wsq.astype(jnp.bfloat16)
    wcat = jnp.concatenate([w1, w3[4]], axis=1).astype(jnp.bfloat16)
    bcat = jnp.concatenate([b1, b3], axis=1)
    side = jnp.stack([w3[k] for k in range(9) if k != 4], axis=0)
    w3p = jnp.concatenate([jnp.zeros((8, Csq, Ce1), side.dtype), side],
                          axis=-1).astype(jnp.bfloat16)

    kernel = functools.partial(_fire_kernel, W=W)

    out_flat = pl.pallas_call(
        kernel,
        out_shape=jax.ShapeDtypeStruct((N, HW, Cout), out_dtype),
        grid_spec=pltpu.PrefetchScalarGridSpec(
            num_scalar_prefetch=0,
            grid=(N, T),
            in_specs=[
                pl.BlockSpec((1, HW, Cin), lambda n, t: (n, 0, 0)),
                pl.BlockSpec((Cin, Csq), lambda n, t: (0, 0)),
                pl.BlockSpec((1, Csq), lambda n, t: (0, 0)),
                pl.BlockSpec((Csq, Cout), lambda n, t: (0, 0)),
                pl.BlockSpec((1, Cout), lambda n, t: (0, 0)),
                pl.BlockSpec((8, Csq, Cout), lambda n, t: (0, 0, 0)),
            ],
            out_specs=pl.BlockSpec((1, THW, Cout), lambda n, t: (n, t, 0)),
            scratch_shapes=[pltpu.VMEM(((H + 2) * W, Csq), jnp.bfloat16)],
        ),
        compiler_params=pltpu.CompilerParams(
            dimension_semantics=("parallel", "arbitrary"),
            vmem_limit_bytes=48 * 1024 * 1024),
    )(x_flat, wsq_bf, bsq, wcat, bcat, w3p)

    return out_flat.reshape(N, H, W, Cout)


def fire_forward(x_nchw, params, *, row_tile=None, out_dtype=jnp.float32):
    """NCHW wrapper matching the PyTorch module layout."""
    # TODO(synk): in a full network keep activations NHWC end-to-end and call
    # fire_forward_nhwc directly; each transpose here is an extra HBM pass.
    x_nhwc = jnp.transpose(x_nchw, (0, 2, 3, 1))
    out_nhwc = fire_forward_nhwc(x_nhwc, params, row_tile=row_tile,
                                 out_dtype=out_dtype)
    return jnp.transpose(out_nhwc, (0, 3, 1, 2))


def init_fire_params(key, inplanes, squeeze_planes, expand1x1_planes,
                     expand3x3_planes):
    """Deterministic synthetic weights (matmul-ready layouts, f32)."""
    k = jax.random.split(key, 6)
    wsq = 0.1 * jax.random.normal(k[0], (inplanes, squeeze_planes), jnp.float32)
    bsq = 0.1 * jax.random.normal(k[1], (1, squeeze_planes), jnp.float32)
    w1 = 0.1 * jax.random.normal(k[2], (squeeze_planes, expand1x1_planes),
                                 jnp.float32)
    b1 = 0.1 * jax.random.normal(k[3], (1, expand1x1_planes), jnp.float32)
    # expand3x3 taps indexed ky*3+kx  -> (9, Csq, Ce3)
    w3 = 0.1 * jax.random.normal(k[4], (9, squeeze_planes, expand3x3_planes),
                                 jnp.float32)
    b3 = 0.1 * jax.random.normal(k[5], (1, expand3x3_planes), jnp.float32)
    return wsq, bsq, w1, b1, w3, b3


def fire_reference(x_nchw, params):
    """Plain-JAX reference (lax convs, NCHW, f32) matching PyTorch forward."""
    wsq, bsq, w1, b1, w3, b3 = params
    Cin, Csq = wsq.shape
    Ce1 = w1.shape[1]
    Ce3 = w3.shape[2]

    def conv(x, w_oihw, b, pad):
        y = jax.lax.conv_general_dilated(
            x, w_oihw, window_strides=(1, 1), padding=pad,
            dimension_numbers=("NCHW", "OIHW", "NCHW"))
        return y + b.reshape(1, -1, 1, 1)

    wsq_oihw = jnp.transpose(wsq, (1, 0)).reshape(Csq, Cin, 1, 1)
    w1_oihw = jnp.transpose(w1, (1, 0)).reshape(Ce1, Csq, 1, 1)
    w3_oihw = jnp.transpose(w3.reshape(3, 3, Csq, Ce3), (3, 2, 0, 1))

    s = jax.nn.relu(conv(x_nchw, wsq_oihw, bsq, "VALID"))
    e1 = jax.nn.relu(conv(s, w1_oihw, b1, "VALID"))
    e3 = jax.nn.relu(conv(s, w3_oihw, b3, [(1, 1), (1, 1)]))
    return jnp.concatenate([e1, e3], axis=1)


if __name__ == "__main__":
    N, Cin, H, W = 2, 4, 16, 16
    Csq, Ce1, Ce3 = 8, 16, 16

    key = jax.random.PRNGKey(0)
    kx, kp = jax.random.split(key)
    x = jax.random.normal(kx, (N, Cin, H, W), jnp.float32)
    params = init_fire_params(kp, Cin, Csq, Ce1, Ce3)

    # row_tile=8 -> 2 row tiles per image: exercises the halo'd row-tiling
    # path (top boundary, interior tile boundary, bottom boundary).
    out = fire_forward(x, params, row_tile=8)
    out = jax.block_until_ready(out)

    ref = fire_reference(x, params)
    assert out.shape == (N, Ce1 + Ce3, H, W), out.shape
    max_err = float(jnp.max(jnp.abs(out - ref)))
    # bf16 matmul operands (f32 accumulate) vs f32 reference -> loose tol.
    assert jnp.allclose(out, ref, atol=3e-2, rtol=3e-2), max_err

    print("KERNEL_OK")
</pallas_src>

<mosaic_0001>
module attributes {stable_mosaic.version = 11 : i64} {
  func.func @_fire_kernel(%arg0: i32, %arg1: i32, %arg2: memref<1x256x4xbf16, #tpu.memory_space<vmem>>, %arg3: memref<4x8xbf16, #tpu.memory_space<vmem>>, %arg4: memref<1x8xf32, #tpu.memory_space<vmem>>, %arg5: memref<8x32xbf16, #tpu.memory_space<vmem>>, %arg6: memref<1x32xf32, #tpu.memory_space<vmem>>, %arg7: memref<8x8x32xbf16, #tpu.memory_space<vmem>>, %arg8: memref<1x128x32xf32, #tpu.memory_space<vmem>>, %arg9: memref<288x8xbf16, #tpu.memory_space<vmem>>) attributes {dimension_semantics = [#tpu.dimension_semantics<parallel>, #tpu.dimension_semantics<arbitrary>], iteration_bounds = array<i64: 2, 2>, scalar_prefetch = 0 : i64, scratch_operands = 1 : i64, tpu.core_type = #tpu.core_type<tc>, window_params = [{transform_indices = @transform_0, window_bounds = array<i64: 1, 256, 4>}, {pipeline_mode = #tpu.pipeline_mode<synchronous>, transform_indices = @transform_1, window_bounds = array<i64: 4, 8>}, {pipeline_mode = #tpu.pipeline_mode<synchronous>, transform_indices = @transform_2, window_bounds = array<i64: 1, 8>}, {pipeline_mode = #tpu.pipeline_mode<synchronous>, transform_indices = @transform_3, window_bounds = array<i64: 8, 32>}, {pipeline_mode = #tpu.pipeline_mode<synchronous>, transform_indices = @transform_4, window_bounds = array<i64: 1, 32>}, {pipeline_mode = #tpu.pipeline_mode<synchronous>, transform_indices = @transform_5, window_bounds = array<i64: 8, 8, 32>}, {transform_indices = @transform_6, window_bounds = array<i64: 1, 128, 32>}]} {
    %c0_i32 = arith.constant 0 : i32
    %0 = arith.cmpi eq, %arg1, %c0_i32 : i32
    %1 = arith.extui %0 : i1 to i32
    %c0_i32_0 = arith.constant 0 : i32
    %2 = arith.cmpi ne, %1, %c0_i32_0 : i32
    scf.if %2 {
      %c0_41 = arith.constant 0 : index
      %c0_42 = arith.constant 0 : index
      %c0_43 = arith.constant 0 : index
      %95 = vector.load %arg2[%c0_41, %c0_42, %c0_43] : memref<1x256x4xbf16, #tpu.memory_space<vmem>>, vector<1x256x4xbf16>
      %96 = vector.shape_cast %95 : vector<1x256x4xbf16> to vector<256x4xbf16>
      %c0_44 = arith.constant 0 : index
      %c0_45 = arith.constant 0 : index
      %97 = vector.load %arg3[%c0_44, %c0_45] : memref<4x8xbf16, #tpu.memory_space<vmem>>, vector<4x8xbf16>
      %cst_46 = arith.constant dense<0.000000e+00> : vector<256x8xf32>
      %98 = tpu.matmul %96, %97, %cst_46 {dimension_numbers = #tpu.dot_dimension_numbers<[1], [0], [0], [1], [0, 0, 1, 1], [], []>} : vector<256x4xbf16>, vector<4x8xbf16>, vector<256x8xf32> -> vector<256x8xf32>
      %c0_47 = arith.constant 0 : index
      %c0_48 = arith.constant 0 : index
      %99 = vector.load %arg4[%c0_47, %c0_48] : memref<1x8xf32, #tpu.memory_space<vmem>>, vector<1x8xf32>
      %100 = vector.broadcast %99 : vector<1x8xf32> to vector<256x8xf32>
      %101 = arith.addf %98, %100 : vector<256x8xf32>
      %cst_49 = arith.constant 0.000000e+00 : f32
      %102 = vector.broadcast %cst_49 : f32 to vector<256x8xf32>
      %103 = arith.maximumf %101, %102 : vector<256x8xf32>
      %cst_50 = arith.constant 0.000000e+00 : bf16
      %104 = vector.broadcast %cst_50 : bf16 to vector<16x8xbf16>
      %c0_51 = arith.constant 0 : index
      %c0_52 = arith.constant 0 : index
      %105 = vector.load %arg9[%c0_51, %c0_52] : memref<288x8xbf16, #tpu.memory_space<vmem>>, vector<16x8xbf16>
      tpu.vector_store %arg9[%c0_51, %c0_52], %104 {strides = array<i32>} : memref<288x8xbf16, #tpu.memory_space<vmem>>, vector<16x8xbf16>,
      %106 = arith.truncf %103 : vector<256x8xf32> to vector<256x8xbf16>
      %c16 = arith.constant 16 : index
      %c0_53 = arith.constant 0 : index
      %107 = vector.load %arg9[%c16, %c0_53] : memref<288x8xbf16, #tpu.memory_space<vmem>>, vector<256x8xbf16>
      tpu.vector_store %arg9[%c16, %c0_53], %106 {strides = array<i32>} : memref<288x8xbf16, #tpu.memory_space<vmem>>, vector<256x8xbf16>,
      %cst_54 = arith.constant 0.000000e+00 : bf16
      %108 = vector.broadcast %cst_54 : bf16 to vector<16x8xbf16>
      %c272 = arith.constant 272 : index
      %c0_55 = arith.constant 0 : index
      %109 = vector.load %arg9[%c272, %c0_55] : memref<288x8xbf16, #tpu.memory_space<vmem>>, vector<16x8xbf16>
      tpu.vector_store %arg9[%c272, %c0_55], %108 {strides = array<i32>} : memref<288x8xbf16, #tpu.memory_space<vmem>>, vector<16x8xbf16>,
    } else {
    }
    %c128_i32 = arith.constant 128 : i32
    %3 = arith.muli %arg1, %c128_i32 : i32
    %4 = tpu.assume_multiple %3, 128 : i32
    %5 = arith.index_cast %4 : i32 to index
    %c0 = arith.constant 0 : index
    %6 = vector.load %arg9[%5, %c0] : memref<288x8xbf16, #tpu.memory_space<vmem>>, vector<160x8xbf16>
    %7 = tpu.iota {dimensions = array<i32: 0>} : vector<160x8xi32>
    %c16_i32 = arith.constant 16 : i32
    %c0_i32_1 = arith.constant 0 : i32
    %8 = arith.cmpi eq, %c16_i32, %c0_i32_1 : i32
    %c1_i32 = arith.constant 1 : i32
    %9 = arith.select %8, %c1_i32, %c16_i32 : i32
    %10 = vector.broadcast %9 : i32 to vector<160x8xi32>
    %11 = arith.remsi %7, %10 : vector<160x8xi32>
    %c0_i32_2 = arith.constant 0 : i32
    %12 = vector.broadcast %c0_i32_2 : i32 to vector<160x8xi32>
    %13 = arith.cmpi ne, %11, %12 : vector<160x8xi32>
    %c0_i32_3 = arith.constant 0 : i32
    %14 = vector.broadcast %c0_i32_3 : i32 to vector<160x8xi32>
    %15 = arith.cmpi slt, %11, %14 : vector<160x8xi32>
    %c0_i32_4 = arith.constant 0 : i32
    %16 = arith.cmpi slt, %9, %c0_i32_4 : i32
    %17 = vector.broadcast %16 : i1 to vector<160x8xi1>
    %18 = vector.broadcast %17 : vector<160x8xi1> to vector<160x8xi1>
    %19 = arith.xori %15, %18 : vector<160x8xi1>
    %20 = arith.andi %19, %13 : vector<160x8xi1>
    %21 = vector.broadcast %9 : i32 to vector<160x8xi32>
    %22 = arith.addi %11, %21 : vector<160x8xi32>
    %23 = arith.select %20, %22, %11 : vector<160x8xi1>, vector<160x8xi32>
    %cst = arith.constant 0.000000e+00 : bf16
    %24 = vector.broadcast %cst : bf16 to vector<160x8xbf16>
    %c0_i32_5 = arith.constant 0 : i32
    %25 = vector.broadcast %c0_i32_5 : i32 to vector<160x8xi32>
    %26 = arith.cmpi eq, %23, %25 : vector<160x8xi32>
    %27 = arith.select %26, %24, %6 : vector<160x8xi1>, vector<160x8xbf16>
    %c15_i32 = arith.constant 15 : i32
    %28 = vector.broadcast %c15_i32 : i32 to vector<160x8xi32>
    %29 = arith.cmpi eq, %23, %28 : vector<160x8xi32>
    %30 = arith.select %29, %24, %6 : vector<160x8xi1>, vector<160x8xbf16>
    %31 = vector.extract_strided_slice %6 {offsets = [16, 0], sizes = [128, 8], strides = [1, 1]} : vector<160x8xbf16> to vector<128x8xbf16>
    %c0_6 = arith.constant 0 : index
    %c0_7 = arith.constant 0 : index
    %32 = vector.load %arg5[%c0_6, %c0_7] : memref<8x32xbf16, #tpu.memory_space<vmem>>, vector<8x32xbf16>
    %cst_8 = arith.constant dense<0.000000e+00> : vector<128x32xf32>
    %33 = tpu.matmul %31, %32, %cst_8 {dimension_numbers = #tpu.dot_dimension_numbers<[1], [0], [0], [1], [0, 0, 1, 1], [], []>} : vector<128x8xbf16>, vector<8x32xbf16>, vector<128x32xf32> -> vector<128x32xf32>
    %c0_9 = arith.constant 0 : index
    %c0_10 = arith.constant 0 : index
    %34 = vector.load %arg6[%c0_9, %c0_10] : memref<1x32xf32, #tpu.memory_space<vmem>>, vector<1x32xf32>
    %35 = vector.broadcast %34 : vector<1x32xf32> to vector<128x32xf32>
    %36 = arith.addf %33, %35 : vector<128x32xf32>
    %cst_11 = arith.constant 0.000000e+00 : bf16
    %37 = vector.broadcast %cst_11 : bf16 to vector<1x8xbf16>
    %38 = vector.extract_strided_slice %30 {offsets = [0, 0], sizes = [128, 8], strides = [1, 1]} : vector<160x8xbf16> to vector<128x8xbf16>
    %39 = vector.extract_strided_slice %38 {offsets = [0, 0], sizes = [127, 8], strides = [1, 1]} : vector<128x8xbf16> to vector<127x8xbf16>
    %40 = tpu.concatenate %37, %39 in 0 : vector<1x8xbf16>, vector<127x8xbf16> -> vector<128x8xbf16>
    %c0_12 = arith.constant 0 : index
    %c0_13 = arith.constant 0 : index
    %c0_14 = arith.constant 0 : index
    %41 = vector.load %arg7[%c0_12, %c0_13, %c0_14] : memref<8x8x32xbf16, #tpu.memory_space<vmem>>, vector<1x8x32xbf16>
    %42 = vector.shape_cast %41 : vector<1x8x32xbf16> to vector<8x32xbf16>
    %cst_15 = arith.constant dense<0.000000e+00> : vector<128x32xf32>
    %43 = tpu.matmul %40, %42, %cst_15 {dimension_numbers = #tpu.dot_dimension_numbers<[1], [0], [0], [1], [0, 0, 1, 1], [], []>} : vector<128x8xbf16>, vector<8x32xbf16>, vector<128x32xf32> -> vector<128x32xf32>
    %44 = arith.addf %36, %43 : vector<128x32xf32>
    %45 = vector.extract_strided_slice %6 {offsets = [0, 0], sizes = [128, 8], strides = [1, 1]} : vector<160x8xbf16> to vector<128x8xbf16>
    %c1 = arith.constant 1 : index
    %c0_16 = arith.constant 0 : index
    %c0_17 = arith.constant 0 : index
    %46 = vector.load %arg7[%c1, %c0_16, %c0_17] : memref<8x8x32xbf16, #tpu.memory_space<vmem>>, vector<1x8x32xbf16>
    %47 = vector.shape_cast %46 : vector<1x8x32xbf16> to vector<8x32xbf16>
    %cst_18 = arith.constant dense<0.000000e+00> : vector<128x32xf32>
    %48 = tpu.matmul %45, %47, %cst_18 {dimension_numbers = #tpu.dot_dimension_numbers<[1], [0], [0], [1], [0, 0, 1, 1], [], []>} : vector<128x8xbf16>, vector<8x32xbf16>, vector<128x32xf32> -> vector<128x32xf32>
    %49 = arith.addf %44, %48 : vector<128x32xf32>
    %50 = vector.extract_strided_slice %27 {offsets = [0, 0], sizes = [128, 8], strides = [1, 1]} : vector<160x8xbf16> to vector<128x8xbf16>
    %51 = vector.extract_strided_slice %50 {offsets = [1, 0], sizes = [127, 8], strides = [1, 1]} : vector<128x8xbf16> to vector<127x8xbf16>
    %52 = tpu.concatenate %51, %37 in 0 : vector<127x8xbf16>, vector<1x8xbf16> -> vector<128x8xbf16>
    %c2 = arith.constant 2 : index
    %c0_19 = arith.constant 0 : index
    %c0_20 = arith.constant 0 : index
    %53 = vector.load %arg7[%c2, %c0_19, %c0_20] : memref<8x8x32xbf16, #tpu.memory_space<vmem>>, vector<1x8x32xbf16>
    %54 = vector.shape_cast %53 : vector<1x8x32xbf16> to vector<8x32xbf16>
    %cst_21 = arith.constant dense<0.000000e+00> : vector<128x32xf32>
    %55 = tpu.matmul %52, %54, %cst_21 {dimension_numbers = #tpu.dot_dimension_numbers<[1], [0], [0], [1], [0, 0, 1, 1], [], []>} : vector<128x8xbf16>, vector<8x32xbf16>, vector<128x32xf32> -> vector<128x32xf32>
    %56 = arith.addf %49, %55 : vector<128x32xf32>
    %57 = vector.extract_strided_slice %30 {offsets = [16, 0], sizes = [128, 8], strides = [1, 1]} : vector<160x8xbf16> to vector<128x8xbf16>
    %58 = vector.extract_strided_slice %57 {offsets = [0, 0], sizes = [127, 8], strides = [1, 1]} : vector<128x8xbf16> to vector<127x8xbf16>
    %59 = tpu.concatenate %37, %58 in 0 : vector<1x8xbf16>, vector<127x8xbf16> -> vector<128x8xbf16>
    %c3 = arith.constant 3 : index
    %c0_22 = arith.constant 0 : index
    %c0_23 = arith.constant 0 : index
    %60 = vector.load %arg7[%c3, %c0_22, %c0_23] : memref<8x8x32xbf16, #tpu.memory_space<vmem>>, vector<1x8x32xbf16>
    %61 = vector.shape_cast %60 : vector<1x8x32xbf16> to vector<8x32xbf16>
    %cst_24 = arith.constant dense<0.000000e+00> : vector<128x32xf32>
    %62 = tpu.matmul %59, %61, %cst_24 {dimension_numbers = #tpu.dot_dimension_numbers<[1], [0], [0], [1], [0, 0, 1, 1], [], []>} : vector<128x8xbf16>, vector<8x32xbf16>, vector<128x32xf32> -> vector<128x32xf32>
    %63 = arith.addf %56, %62 : vector<128x32xf32>
    %64 = vector.extract_strided_slice %27 {offsets = [16, 0], sizes = [128, 8], strides = [1, 1]} : vector<160x8xbf16> to vector<128x8xbf16>
    %65 = vector.extract_strided_slice %64 {offsets = [1, 0], sizes = [127, 8], strides = [1, 1]} : vector<128x8xbf16> to vector<127x8xbf16>
    %66 = tpu.concatenate %65, %37 in 0 : vector<127x8xbf16>, vector<1x8xbf16> -> vector<128x8xbf16>
    %c4 = arith.constant 4 : index
    %c0_25 = arith.constant 0 : index
    %c0_26 = arith.constant 0 : index
    %67 = vector.load %arg7[%c4, %c0_25, %c0_26] : memref<8x8x32xbf16, #tpu.memory_space<vmem>>, vector<1x8x32xbf16>
    %68 = vector.shape_cast %67 : vector<1x8x32xbf16> to vector<8x32xbf16>
    %cst_27 = arith.constant dense<0.000000e+00> : vector<128x32xf32>
    %69 = tpu.matmul %66, %68, %cst_27 {dimension_numbers = #tpu.dot_dimension_numbers<[1], [0], [0], [1], [0, 0, 1, 1], [], []>} : vector<128x8xbf16>, vector<8x32xbf16>, vector<128x32xf32> -> vector<128x32xf32>
    %70 = arith.addf %63, %69 : vector<128x32xf32>
    %71 = vector.extract_strided_slice %30 {offsets = [32, 0], sizes = [128, 8], strides = [1, 1]} : vector<160x8xbf16> to vector<128x8xbf16>
    %72 = vector.extract_strided_slice %71 {offsets = [0, 0], sizes = [127, 8], strides = [1, 1]} : vector<128x8xbf16> to vector<127x8xbf16>
    %73 = tpu.concatenate %37, %72 in 0 : vector<1x8xbf16>, vector<127x8xbf16> -> vector<128x8xbf16>
    %c5 = arith.constant 5 : index
    %c0_28 = arith.constant 0 : index
    %c0_29 = arith.constant 0 : index
    %74 = vector.load %arg7[%c5, %c0_28, %c0_29] : memref<8x8x32xbf16, #tpu.memory_space<vmem>>, vector<1x8x32xbf16>
    %75 = vector.shape_cast %74 : vector<1x8x32xbf16> to vector<8x32xbf16>
    %cst_30 = arith.constant dense<0.000000e+00> : vector<128x32xf32>
    %76 = tpu.matmul %73, %75, %cst_30 {dimension_numbers = #tpu.dot_dimension_numbers<[1], [0], [0], [1], [0, 0, 1, 1], [], []>} : vector<128x8xbf16>, vector<8x32xbf16>, vector<128x32xf32> -> vector<128x32xf32>
    %77 = arith.addf %70, %76 : vector<128x32xf32>
    %78 = vector.extract_strided_slice %6 {offsets = [32, 0], sizes = [128, 8], strides = [1, 1]} : vector<160x8xbf16> to vector<128x8xbf16>
    %c6 = arith.constant 6 : index
    %c0_31 = arith.constant 0 : index
    %c0_32 = arith.constant 0 : index
    %79 = vector.load %arg7[%c6, %c0_31, %c0_32] : memref<8x8x32xbf16, #tpu.memory_space<vmem>>, vector<1x8x32xbf16>
    %80 = vector.shape_cast %79 : vector<1x8x32xbf16> to vector<8x32xbf16>
    %cst_33 = arith.constant dense<0.000000e+00> : vector<128x32xf32>
    %81 = tpu.matmul %78, %80, %cst_33 {dimension_numbers = #tpu.dot_dimension_numbers<[1], [0], [0], [1], [0, 0, 1, 1], [], []>} : vector<128x8xbf16>, vector<8x32xbf16>, vector<128x32xf32> -> vector<128x32xf32>
    %82 = arith.addf %77, %81 : vector<128x32xf32>
    %83 = vector.extract_strided_slice %27 {offsets = [32, 0], sizes = [128, 8], strides = [1, 1]} : vector<160x8xbf16> to vector<128x8xbf16>
    %84 = vector.extract_strided_slice %83 {offsets = [1, 0], sizes = [127, 8], strides = [1, 1]} : vector<128x8xbf16> to vector<127x8xbf16>
    %85 = tpu.concatenate %84, %37 in 0 : vector<127x8xbf16>, vector<1x8xbf16> -> vector<128x8xbf16>
    %c7 = arith.constant 7 : index
    %c0_34 = arith.constant 0 : index
    %c0_35 = arith.constant 0 : index
    %86 = vector.load %arg7[%c7, %c0_34, %c0_35] : memref<8x8x32xbf16, #tpu.memory_space<vmem>>, vector<1x8x32xbf16>
    %87 = vector.shape_cast %86 : vector<1x8x32xbf16> to vector<8x32xbf16>
    %cst_36 = arith.constant dense<0.000000e+00> : vector<128x32xf32>
    %88 = tpu.matmul %85, %87, %cst_36 {dimension_numbers = #tpu.dot_dimension_numbers<[1], [0], [0], [1], [0, 0, 1, 1], [], []>} : vector<128x8xbf16>, vector<8x32xbf16>, vector<128x32xf32> -> vector<128x32xf32>
    %89 = arith.addf %82, %88 : vector<128x32xf32>
    %cst_37 = arith.constant 0.000000e+00 : f32
    %90 = vector.broadcast %cst_37 : f32 to vector<128x32xf32>
    %91 = arith.maximumf %89, %90 : vector<128x32xf32>
    %c0_38 = arith.constant 0 : index
    %c0_39 = arith.constant 0 : index
    %c0_40 = arith.constant 0 : index
    %92 = vector.load %arg8[%c0_38, %c0_39, %c0_40] : memref<1x128x32xf32, #tpu.memory_space<vmem>>, vector<1x128x32xf32>
    %93 = vector.shape_cast %92 : vector<1x128x32xf32> to vector<128x32xf32>
    %94 = vector.shape_cast %91 : vector<128x32xf32> to vector<1x128x32xf32>
    tpu.vector_store %arg8[%c0_38, %c0_39, %c0_40], %94 {strides = array<i32>} : memref<1x128x32xf32, #tpu.memory_space<vmem>>, vector<1x128x32xf32>,
    return
  }
  func.func @transform_0(%arg0: i32, %arg1: i32) -> (i32, i32, i32) {
    %c0_i32 = arith.constant 0 : i32
    %c0_i32_0 = arith.constant 0 : i32
    %c0_i32_1 = arith.constant 0 : i32
    return %arg0, %c0_i32, %c0_i32_0 : i32, i32, i32
  }
  func.func @transform_1(%arg0: i32, %arg1: i32) -> (i32, i32) {
    %c0_i32 = arith.constant 0 : i32
    %c0_i32_0 = arith.constant 0 : i32
    %c0_i32_1 = arith.constant 0 : i32
    return %c0_i32, %c0_i32_0 : i32, i32
  }
  func.func @transform_2(%arg0: i32, %arg1: i32) -> (i32, i32) {
    %c0_i32 = arith.constant 0 : i32
    %c0_i32_0 = arith.constant 0 : i32
    %c0_i32_1 = arith.constant 0 : i32
    return %c0_i32, %c0_i32_0 : i32, i32
  }
  func.func @transform_3(%arg0: i32, %arg1: i32) -> (i32, i32) {
    %c0_i32 = arith.constant 0 : i32
    %c0_i32_0 = arith.constant 0 : i32
    %c0_i32_1 = arith.constant 0 : i32
    return %c0_i32, %c0_i32_0 : i32, i32
  }
  func.func @transform_4(%arg0: i32, %arg1: i32) -> (i32, i32) {
    %c0_i32 = arith.constant 0 : i32
    %c0_i32_0 = arith.constant 0 : i32
    %c0_i32_1 = arith.constant 0 : i32
    return %c0_i32, %c0_i32_0 : i32, i32
  }
  func.func @transform_5(%arg0: i32, %arg1: i32) -> (i32, i32, i32) {
    %c0_i32 = arith.constant 0 : i32
    %c0_i32_0 = arith.constant 0 : i32
    %c0_i32_1 = arith.constant 0 : i32
    %c0_i32_2 = arith.constant 0 : i32
    return %c0_i32, %c0_i32_0, %c0_i32_1 : i32, i32, i32
  }
  func.func @transform_6(%arg0: i32, %arg1: i32) -> (i32, i32, i32) {
    %c0_i32 = arith.constant 0 : i32
    %c0_i32_0 = arith.constant 0 : i32
    return %arg0, %arg1, %c0_i32 : i32, i32, i32
  }
}

</mosaic_0001>

<llo_original>
// kernel: tpu_custom_call.1
$region0: #{tpu_custom_call.1}
  #allocation0 [shape = 'u32[]', space=smem, size = 0x4, offset = 0x4, fixed_abs, tag = 'smem constant byte address 0x4 - core index']
  #allocation1 [shape = 'u32[144,128]{1,0:T(1,128)}', space=vmem, size = 0x12000, scoped, tag = 'internal scratch']
  #allocation2 [shape = 'bf16[288,8]{1,0:T(8,128)(2,1)}', space=vmem, size = 0x12000, scoped, tag = 'scratch operand']
  %s0 = inlined_call_operand.vmem [shape: bf16[2,256,4], index: 0, kind: input, shape index: {}]
  %s1 = inlined_call_operand.vmem [shape: bf16[4,8], index: 1, kind: input, shape index: {}]
  %s2 = inlined_call_operand.vmem [shape: f32[1,8], index: 2, kind: input, shape index: {}]
  %s3 = inlined_call_operand.vmem [shape: bf16[8,32], index: 3, kind: input, shape index: {}]
  %s4 = inlined_call_operand.vmem [shape: f32[1,32], index: 4, kind: input, shape index: {}]
  %s5 = inlined_call_operand.vmem [shape: bf16[8,8,32], index: 5, kind: input, shape index: {}]
  %s6 = inlined_call_operand.vmem [shape: f32[2,256,32], index: 6, kind: output, shape index: {}]
  %s7 = sld [smem:[#allocation0]]
  $region61: #{tpu_custom_call.1} parent=0
    _
  %s9 = ssub.s32 1, %s7
  %s10 = scalar_select 0, %s9, %s7
  loop: start=0, step=1, limit=6
  $region2: #{tpu_custom_call.1} parent=0 // loop_pre_header
    _
  $region3: #{tpu_custom_call.1} parent=0 // loop_header
    %s12 = sphi 0, %s16
    %p13 = scmp.ge.s32.totalorder %s12, 6
    %s19 = sphi 0, %s31
    %s20 = sphi 0, %s27
    %s21 = sphi 0, %s19
    %s22 = sphi 0, %s20
    %s23 = sphi 0, %s21
    %s24 = sphi 0, %s22
    %s34 = sphi 0, %s36
    %s37 = sphi 0, %s34
    %s38 = sphi 0, %s37
    %s54 = sphi 0, %s38
    %s58 = sphi 0, %s58
    %s60 = sphi 0, %s58
    %s61 = sphi 0, %s60
    %s75 = sphi 0, %s61
    %s79 = sphi 0, %s79
    %s81 = sphi 0, %s79
    %s82 = sphi 0, %s81
    %s96 = sphi 0, %s82
    %s100 = sphi 0, %s100
    %s102 = sphi 0, %s100
    %s103 = sphi 0, %s102
    %s117 = sphi 0, %s103
    %s121 = sphi 0, %s121
    %s123 = sphi 0, %s121
    %s124 = sphi 0, %s123
    %s138 = sphi 0, %s124
    %s142 = sphi 0, %s142
    %s144 = sphi 0, %s142
    %s145 = sphi 0, %s144
    %s159 = sphi 0, %s145
    %s167 = sphi 0, %s169
    %s170 = sphi 0, %s167
    %s171 = sphi 0, %s170
    %s187 = sphi 0, %s171
  $region4: #{tpu_custom_call.1} parent=0 // loop_header_branch
    %15 = sbr.rel (%p13) target = $region8
  $region5: #{tpu_custom_call.1} parent=0 // loop_body
    %s17 = ssub.s32 %s12, 1
    %s18 = ssub.s32 %s12, 2
    %s25 = sadd.s32 1, %s20
    %p26 = scmp.ge.s32.totalorder %s25, 2
    %s27 = scalar_select %p26, 0, %s25
    %s28 = sadd.s32 1, %s19
    %s29 = scalar_select %p26, %s28, %s19
    %p30 = scmp.ge.s32.totalorder %s29, 2
    %s31 = scalar_select %p30, 0, %s29
    %s32 = ssub.s32 %s19, %s31
    %p33 = scmp.eq.s32.totalorder %s32, 0
    %s35 = sadd.s32 %s34, 1
    %s36 = scalar_select %p33, %s34, %s35
    %p39 = pneg %p33
    %p40 = scmp.eq.s32.totalorder %s12, 3
    %p41 = por %p39, %p40
    %p42 = scmp.ne.s32.totalorder %s34, %s37
    %p43 = scmp.eq.s32.totalorder %s12, 0
    %p44 = por %p42, %p43
    %p45 = scmp.ne.s32.totalorder %s34, %s37
    %p46 = scmp.eq.s32.totalorder %s17, 3
    %p47 = por %p45, %p46
    %p48 = scmp.ne.s32.totalorder %s37, %s38
    %p49 = scmp.eq.s32.totalorder %s17, 0
    %p50 = por %p48, %p49
    %p51 = scmp.ne.s32.totalorder %s37, %s38
    %p52 = scmp.eq.s32.totalorder %s18, 3
    %p53 = por %p51, %p52
    %p55 = scmp.ne.s32.totalorder %s38, %s54
    %p56 = scmp.eq.s32.totalorder %s18, 0
    %p57 = por %p55, %p56
    %s59 = sadd.s32 %s58, 1
    %p62 = scmp.eq.s32.totalorder %s12, 3
    %p63 = scmp.ne.s32.totalorder %s58, %s60
    %p64 = scmp.eq.s32.totalorder %s12, 0
    %p65 = por %p63, %p64
    %p66 = scmp.ne.s32.totalorder %s58, %s60
    %p67 = scmp.eq.s32.totalorder %s17, 3
    %p68 = por %p66, %p67
    %p69 = scmp.ne.s32.totalorder %s60, %s61
    %p70 = scmp.eq.s32.totalorder %s17, 0
    %p71 = por %p69, %p70
    %p72 = scmp.ne.s32.totalorder %s60, %s61
    %p73 = scmp.eq.s32.totalorder %s18, 3
    %p74 = por %p72, %p73
    %p76 = scmp.ne.s32.totalorder %s61, %s75
    %p77 = scmp.eq.s32.totalorder %s18, 0
    %p78 = por %p76, %p77
    %s80 = sadd.s32 %s79, 1
    %p83 = scmp.eq.s32.totalorder %s12, 3
    %p84 = scmp.ne.s32.totalorder %s79, %s81
    %p85 = scmp.eq.s32.totalorder %s12, 0
    %p86 = por %p84, %p85
    %p87 = scmp.ne.s32.totalorder %s79, %s81
    %p88 = scmp.eq.s32.totalorder %s17, 3
    %p89 = por %p87, %p88
    %p90 = scmp.ne.s32.totalorder %s81, %s82
    %p91 = scmp.eq.s32.totalorder %s17, 0
    %p92 = por %p90, %p91
    %p93 = scmp.ne.s32.totalorder %s81, %s82
    %p94 = scmp.eq.s32.totalorder %s18, 3
    %p95 = por %p93, %p94
    %p97 = scmp.ne.s32.totalorder %s82, %s96
    %p98 = scmp.eq.s32.totalorder %s18, 0
    %p99 = por %p97, %p98
    %s101 = sadd.s32 %s100, 1
    %p104 = scmp.eq.s32.totalorder %s12, 3
    %p105 = scmp.ne.s32.totalorder %s100, %s102
    %p106 = scmp.eq.s32.totalorder %s12, 0
    %p107 = por %p105, %p106
    %p108 = scmp.ne.s32.totalorder %s100, %s102
    %p109 = scmp.eq.s32.totalorder %s17, 3
    %p110 = por %p108, %p109
    %p111 = scmp.ne.s32.totalorder %s102, %s103
    %p112 = scmp.eq.s32.totalorder %s17, 0
    %p113 = por %p111, %p112
    %p114 = scmp.ne.s32.totalorder %s102, %s103
    %p115 = scmp.eq.s32.totalorder %s18, 3
    %p116 = por %p114, %p115
    %p118 = scmp.ne.s32.totalorder %s103, %s117
    %p119 = scmp.eq.s32.totalorder %s18, 0
    %p120 = por %p118, %p119
    %s122 = sadd.s32 %s121, 1
    %p125 = scmp.eq.s32.totalorder %s12, 3
    %p126 = scmp.ne.s32.totalorder %s121, %s123
    %p127 = scmp.eq.s32.totalorder %s12, 0
    %p128 = por %p126, %p127
    %p129 = scmp.ne.s32.totalorder %s121, %s123
    %p130 = scmp.eq.s32.totalorder %s17, 3
    %p131 = por %p129, %p130
    %p132 = scmp.ne.s32.totalorder %s123, %s124
    %p133 = scmp.eq.s32.totalorder %s17, 0
    %p134 = por %p132, %p133
    %p135 = scmp.ne.s32.totalorder %s123, %s124
    %p136 = scmp.eq.s32.totalorder %s18, 3
    %p137 = por %p135, %p136
    %p139 = scmp.ne.s32.totalorder %s124, %s138
    %p140 = scmp.eq.s32.totalorder %s18, 0
    %p141 = por %p139, %p140
    %s143 = sadd.s32 %s142, 1
    %p146 = scmp.eq.s32.totalorder %s12, 3
    %p147 = scmp.ne.s32.totalorder %s142, %s144
    %p148 = scmp.eq.s32.totalorder %s12, 0
    %p149 = por %p147, %p148
    %p150 = scmp.ne.s32.totalorder %s142, %s144
    %p151 = scmp.eq.s32.totalorder %s17, 3
    %p152 = por %p150, %p151
    %p153 = scmp.ne.s32.totalorder %s144, %s145
    %p154 = scmp.eq.s32.totalorder %s17, 0
    %p155 = por %p153, %p154
    %p156 = scmp.ne.s32.totalorder %s144, %s145
    %p157 = scmp.eq.s32.totalorder %s18, 3
    %p158 = por %p156, %p157
    %p160 = scmp.ne.s32.totalorder %s145, %s159
    %p161 = scmp.eq.s32.totalorder %s18, 0
    %p162 = por %p160, %p161
    %s163 = ssub.s32 %s19, %s31
    %s164 = ssub.s32 %s20, %s27
    %s165 = sor.u32 %s163, %s164
    %p166 = scmp.eq.s32.totalorder %s165, 0
    %s168 = sadd.s32 %s167, 1
    %s169 = scalar_select %p166, %s167, %s168
    %p172 = pneg %p166
    %p173 = scmp.eq.s32.totalorder %s12, 3
    %p174 = por %p172, %p173
    %p175 = scmp.ne.s32.totalorder %s167, %s170
    %p176 = scmp.eq.s32.totalorder %s12, 0
    %p177 = por %p175, %p176
    %p178 = scmp.ne.s32.totalorder %s167, %s170
    %p179 = scmp.eq.s32.totalorder %s17, 3
    %p180 = por %p178, %p179
    %p181 = scmp.ne.s32.totalorder %s170, %s171
    %p182 = scmp.eq.s32.totalorder %s17, 0
    %p183 = por %p181, %p182
    %p184 = scmp.ne.s32.totalorder %s170, %s171
    %p185 = scmp.eq.s32.totalorder %s18, 3
    %p186 = por %p184, %p185
    %p188 = scmp.ne.s32.totalorder %s171, %s187
    %p189 = scmp.eq.s32.totalorder %s18, 0
    %p190 = por %p188, %p189
    %p191 = scmp.le.s32.totalorder 1, %s12
    %p192 = scmp.lt.s32.totalorder %s12, 5
    %p193 = pnand %p191, %p192
    %p194 = pneg %p193
    // Predicated region
    $region9: #{tpu_custom_call.1} parent=5 // pred_check
      _
    $region10: #{tpu_custom_call.1} parent=5 // pred_check_branch
      %196 = sbr.rel (%p193) target = $region12
    $region11: #{tpu_custom_call.1} parent=5 // pred_region
      %s197 = ssub.s32 %s12, 1
      // Predicated region
      $region13: #{tpu_custom_call.1} parent=11 // pred_check
        %p198 = pneg %p71
      $region14: #{tpu_custom_call.1} parent=11 // pred_check_branch
        %200 = sbr.rel (%p198) target = $region16
      $region15: #{tpu_custom_call.1} parent=11 // pred_region
        _
      $region16: #{tpu_custom_call.1} parent=11 // pred_fallthru
        _
      // Predicated region
      $region17: #{tpu_custom_call.1} parent=11 // pred_check
        %p201 = pneg %p92
      $region18: #{tpu_custom_call.1} parent=11 // pred_check_branch
        %203 = sbr.rel (%p201) target = $region20
      $region19: #{tpu_custom_call.1} parent=11 // pred_region
        _
      $region20: #{tpu_custom_call.1} parent=11 // pred_fallthru
        _
      // Predicated region
      $region21: #{tpu_custom_call.1} parent=11 // pred_check
        %p204 = pneg %p113
      $region22: #{tpu_custom_call.1} parent=11 // pred_check_branch
        %206 = sbr.rel (%p204) target = $region24
      $region23: #{tpu_custom_call.1} parent=11 // pred_region
        _
      $region24: #{tpu_custom_call.1} parent=11 // pred_fallthru
        _
      // Predicated region
      $region25: #{tpu_custom_call.1} parent=11 // pred_check
        %p207 = pneg %p134
      $region26: #{tpu_custom_call.1} parent=11 // pred_check_branch
        %209 = sbr.rel (%p207) target = $region28
      $region27: #{tpu_custom_call.1} parent=11 // pred_region
        _
      $region28: #{tpu_custom_call.1} parent=11 // pred_fallthru
        _
      // Predicated region
      $region29: #{tpu_custom_call.1} parent=11 // pred_check
        %p210 = pneg %p155
      $region30: #{tpu_custom_call.1} parent=11 // pred_check_branch
        %212 = sbr.rel (%p210) target = $region32
      $region31: #{tpu_custom_call.1} parent=11 // pred_region
        _
      $region32: #{tpu_custom_call.1} parent=11 // pred_fallthru
        _
    $region12: #{tpu_custom_call.1} parent=5 // pred_fallthru
      _
    %p213 = scmp.lt.s32.totalorder %s12, 4
    // Predicated region
    $region33: #{tpu_custom_call.1} parent=5 // pred_check
      %p214 = pneg %p213
    $region34: #{tpu_custom_call.1} parent=5 // pred_check_branch
      %216 = sbr.rel (%p214) target = $region36
    $region35: #{tpu_custom_call.1} parent=5 // pred_region
      // Predicated region
      $region37: #{tpu_custom_call.1} parent=35 // pred_check
        %p217 = pneg %p44
      $region38: #{tpu_custom_call.1} parent=35 // pred_check_branch
        %219 = sbr.rel (%p217) target = $region40
      $region39: #{tpu_custom_call.1} parent=35 // pred_region
        %p220 = scmp.lt.s32.totalorder %s19, 1
        %s221 = scalar_select %p220, %s19, 1
        %s222 = smul.addr %s221, 32
        %s223 = smul.addr %s222, 4
        %s224 = scalar_lea.vmem %s0, %s223
      $region40: #{tpu_custom_call.1} parent=35 // pred_fallthru
        _
    $region36: #{tpu_custom_call.1} parent=5 // pred_fallthru
      _
    %p225 = scmp.le.s32.totalorder 1, %s12
    %p226 = scmp.lt.s32.totalorder %s12, 5
    %p227 = pnand %p225, %p226
    %p228 = pneg %p227
    // Predicated region
    $region41: #{tpu_custom_call.1} parent=5 // pred_check
      _
    $region42: #{tpu_custom_call.1} parent=5 // pred_check_branch
      %230 = sbr.rel (%p227) target = $region44
    $region43: #{tpu_custom_call.1} parent=5 // pred_region
      %s231 = ssub.s32 %s12, 1
      %p232 = scmp.lt.s32.totalorder %s21, 1
      %s233 = scalar_select %p232, %s21, 1
      %s234 = smul.addr %s233, 32
      %s235 = smul.addr %s234, 4
      %s236 = scalar_lea.vmem %s0, %s235
      %p237 = pneg %p50
      %p238 = pneg %p47
      %p239 = pneg %p71
      %p240 = pneg %p68
      %p241 = pneg %p92
      %p242 = pneg %p89
      %p243 = pneg %p113
      %p244 = pneg %p110
      %p245 = pneg %p134
      %p246 = pneg %p131
      %p247 = pneg %p155
      %p248 = pneg %p152
      %p249 = pneg %p183
      %p250 = pneg %p180
      %s251 = smul.u32 16, %s22
      %p252 = scmp.lt.s32.totalorder %s21, 1
      %s253 = scalar_select %p252, %s21, 1
      %p254 = scmp.lt.s32.totalorder %s251, 31
      %s255 = scalar_select %p254, %s251, 31
      %s256 = smul.addr %s253, 32
      %s257 = sadd.s32 %s255, %s256
      %s258 = smul.addr %s257, 8
      %s259 = scalar_lea.vmem %s6, %s258
      %p260 = scmp.lt.s32.totalorder %s21, 1
      %s261 = scalar_select %p260, %s21, 1
      %s262 = smul.addr %s261, 32
      %s263 = smul.addr %s262, 4
      %s264 = scalar_lea.vmem %s0, %s263
      %s265 = smul.u32 16, %s22
      %p266 = scmp.lt.s32.totalorder %s21, 1
      %s267 = scalar_select %p266, %s21, 1
      %p268 = scmp.lt.s32.totalorder %s265, 31
      %s269 = scalar_select %p268, %s265, 31
      %s270 = smul.addr %s267, 32
      %s271 = sadd.s32 %s269, %s270
      %s272 = smul.addr %s271, 8
      %s273 = scalar_lea.vmem %s6, %s272
      %s274 = smul.u32 16, %s22
      %p276 = scmp.eq.s32.totalorder %s22, 0
      // Predicated region
      $region45: #{tpu_custom_call.1} parent=43 // pred_check
        %p277 = pneg %p276
      $region46: #{tpu_custom_call.1} parent=43 // pred_check_branch
        %279 = sbr.rel (%p277) target = $region48
      $region47: #{tpu_custom_call.1} parent=43 // pred_region
        %v280 = vld [vmem:[%s264] sm:$0xf]
        %v281 = vld [vmem:[%s264 + $0x4] sm:$0xf]
        %v282 = vld [vmem:[%s264 + $0x8] sm:$0xf]
        %v283 = vld [vmem:[%s264 + $0xc] sm:$0xf]
        %v284 = vld [vmem:[%s264 + $0x10] sm:$0xf]
        %v285 = vld [vmem:[%s264 + $0x14] sm:$0xf]
        %v286 = vld [vmem:[%s264 + $0x18] sm:$0xf]
        %v287 = vld [vmem:[%s264 + $0x1c] sm:$0xf]
        %v288 = vld [vmem:[%s264 + $0x20] sm:$0xf]
        %v289 = vld [vmem:[%s264 + $0x24] sm:$0xf]
        %v290 = vld [vmem:[%s264 + $0x28] sm:$0xf]
        %v291 = vld [vmem:[%s264 + $0x2c] sm:$0xf]
        %v292 = vld [vmem:[%s264 + $0x30] sm:$0xf]
        %v293 = vld [vmem:[%s264 + $0x34] sm:$0xf]
        %v294 = vld [vmem:[%s264 + $0x38] sm:$0xf]
        %v295 = vld [vmem:[%s264 + $0x3c] sm:$0xf]
        %v296 = vld [vmem:[%s264 + $0x40] sm:$0xf]
        %v297 = vld [vmem:[%s264 + $0x44] sm:$0xf]
        %v298 = vld [vmem:[%s264 + $0x48] sm:$0xf]
        %v299 = vld [vmem:[%s264 + $0x4c] sm:$0xf]
        %v300 = vld [vmem:[%s264 + $0x50] sm:$0xf]
        %v301 = vld [vmem:[%s264 + $0x54] sm:$0xf]
        %v302 = vld [vmem:[%s264 + $0x58] sm:$0xf]
        %v303 = vld [vmem:[%s264 + $0x5c] sm:$0xf]
        %v304 = vld [vmem:[%s264 + $0x60] sm:$0xf]
        %v305 = vld [vmem:[%s264 + $0x64] sm:$0xf]
        %v306 = vld [vmem:[%s264 + $0x68] sm:$0xf]
        %v307 = vld [vmem:[%s264 + $0x6c] sm:$0xf]
        %v308 = vld [vmem:[%s264 + $0x70] sm:$0xf]
        %v309 = vld [vmem:[%s264 + $0x74] sm:$0xf]
        %v310 = vld [vmem:[%s264 + $0x78] sm:$0xf]
        %v311 = vld [vmem:[%s264 + $0x7c] sm:$0xf]
        %v312 = vld [vmem:[%s1] sm:$0x3]
        %v313 = vld [vmem:[%s2] sm:$0x1]
        %v315 = vlaneseq
        %v316 = vshrl.u32 %v315, 7
        %v317 = vsub.s32 0, %v316
        %v318 = vrot.slane %v313, %v317
        %v352 = vunpack.c.l.b16 %v280
        %v353 = vunpack.c.l.b16 %v281
        %v354 = vunpack.c.l.b16 %v282
        %v355 = vunpack.c.l.b16 %v283
        %v356 = vunpack.c.l.b16 %v284
        %v357 = vunpack.c.l.b16 %v285
        %v358 = vunpack.c.l.b16 %v286
        %v359 = vunpack.c.l.b16 %v287
        %v360 = vunpack.c.l.b16 %v288
        %v361 = vunpack.c.l.b16 %v289
        %v362 = vunpack.c.l.b16 %v290
        %v363 = vunpack.c.l.b16 %v291
        %v364 = vunpack.c.l.b16 %v292
        %v365 = vunpack.c.l.b16 %v293
        %v366 = vunpack.c.l.b16 %v294
        %v367 = vunpack.c.l.b16 %v295
        %v368 = vunpack.c.l.b16 %v296
        %v369 = vunpack.c.l.b16 %v297
        %v370 = vunpack.c.l.b16 %v298
        %v371 = vunpack.c.l.b16 %v299
        %v372 = vunpack.c.l.b16 %v300
        %v373 = vunpack.c.l.b16 %v301
        %v374 = vunpack.c.l.b16 %v302
        %v375 = vunpack.c.l.b16 %v303
        %v376 = vunpack.c.l.b16 %v304
        %v377 = vunpack.c.l.b16 %v305
        %v378 = vunpack.c.l.b16 %v306
        %v379 = vunpack.c.l.b16 %v307
        %v380 = vunpack.c.l.b16 %v308
        %v381 = vunpack.c.l.b16 %v309
        %v382 = vunpack.c.l.b16 %v310
        %v383 = vunpack.c.l.b16 %v311
        %v384 = vpack.c.b16 %v353, %v352
        %v385 = vpack.c.b16 %v355, %v354
        %v386 = vpack.c.b16 %v357, %v356
        %v387 = vpack.c.b16 %v359, %v358
        %v388 = vpack.c.b16 %v361, %v360
        %v389 = vpack.c.b16 %v363, %v362
        %v390 = vpack.c.b16 %v365, %v364
        %v391 = vpack.c.b16 %v367, %v366
        %v392 = vpack.c.b16 %v369, %v368
        %v393 = vpack.c.b16 %v371, %v370
        %v394 = vpack.c.b16 %v373, %v372
        %v395 = vpack.c.b16 %v375, %v374
        %v396 = vpack.c.b16 %v377, %v376
        %v397 = vpack.c.b16 %v379, %v378
        %v398 = vpack.c.b16 %v381, %v380
        %v399 = vpack.c.b16 %v383, %v382
        %vm400 = vcmask 31744
        %v402 = vsel %vm400, %v384, 0
        %v405 = vsel %vm400, %v385, 0
        %v408 = vsel %vm400, %v386, 0
        %v411 = vsel %vm400, %v387, 0
        %v414 = vsel %vm400, %v388, 0
        %v417 = vsel %vm400, %v389, 0
        %v420 = vsel %vm400, %v390, 0
        %v423 = vsel %vm400, %v391, 0
        %v426 = vsel %vm400, %v392, 0
        %v429 = vsel %vm400, %v393, 0
        %v432 = vsel %vm400, %v394, 0
        %v435 = vsel %vm400, %v395, 0
        %v438 = vsel %vm400, %v396, 0
        %v441 = vsel %vm400, %v397, 0
        %v444 = vsel %vm400, %v398, 0
        %v447 = vsel %vm400, %v399, 0
        %vm449 = vcmask 1041408
        %v451 = vsel %vm449, %v312, 0
        %453 = vmatprep.subr.bf16.mxu0 0
        %454 = vmatpush1.bf16.msra.mxu0 0
        %455 = vmatprep.subr.bf16.mxu0 0
        %456 = vmatpush1.bf16.msra.mxu0 0
        %457 = vmatprep.subr.bf16.mxu0 0
        %458 = vmatpush1.bf16.msra.mxu0 0
        %459 = vmatprep.subr.bf16.mxu0 0
        %460 = vmatpush1.bf16.msra.mxu0 0
        %461 = vmatprep.subr.bf16.mxu0 0
        %462 = vmatpush1.bf16.msra.mxu0 0
        %463 = vmatprep.subr.bf16.mxu0 0
        %464 = vmatpush1.bf16.msra.mxu0 0
        %465 = vmatprep.subr.bf16.mxu0 0
        %466 = vmatpush1.bf16.msra.mxu0 0
        %467 = vmatprep.subr.bf16.mxu0 0
        %468 = vmatpush1.bf16.msra.mxu0 %v451
        %469 = vmatprep.subr.bf16.mxu0 0
        %470 = vmatpush2.bf16.msra.mxu0 0
        %471 = vmatprep.subr.bf16.mxu0 0
        %472 = vmatpush2.bf16.msra.mxu0 0
        %473 = vmatprep.subr.bf16.mxu0 0
        %474 = vmatpush2.bf16.msra.mxu0 0
        %475 = vmatprep.subr.bf16.mxu0 0
        %476 = vmatpush2.bf16.msra.mxu0 0
        %477 = vmatprep.subr.bf16.mxu0 0
        %478 = vmatpush2.bf16.msra.mxu0 0
        %479 = vmatprep.subr.bf16.mxu0 0
        %480 = vmatpush2.bf16.msra.mxu0 0
        %481 = vmatprep.subr.bf16.mxu0 0
        %482 = vmatpush2.bf16.msra.mxu0 0
        %483 = vmatprep.subr.bf16.mxu0 0
        %484 = vmatpush2.bf16.msra.mxu0 0
        %485 = vmatprep.mubr.bf16.mxu0 0
        %486 = vmatmul.mubr.bf16.gmra.mxu0 %v402
        %v487 = vpop.f32.mrf.mxu0
        %v488 = vadd.f32 %v318, %v487
        %v489 = vpop.f32.mrf.mxu0
        %v490 = vpop.f32.mrf.mxu0
        %v491 = vadd.f32 %v318, %v490
        %v492 = vpop.f32.mrf.mxu0
        %493 = vmatprep.mubr.bf16.mxu0 0
        %494 = vmatmul.mubr.bf16.gmra.mxu0 %v405
        %v495 = vpop.f32.mrf.mxu0
        %v496 = vadd.f32 %v318, %v495
        %v497 = vpop.f32.mrf.mxu0
        %v498 = vpop.f32.mrf.mxu0
        %v499 = vadd.f32 %v318, %v498
        %v500 = vpop.f32.mrf.mxu0
        %501 = vmatprep.mubr.bf16.mxu0 0
        %502 = vmatmul.mubr.bf16.gmra.mxu0 %v408
        %v503 = vpop.f32.mrf.mxu0
        %v504 = vadd.f32 %v318, %v503
        %v505 = vpop.f32.mrf.mxu0
        %v506 = vpop.f32.mrf.mxu0
        %v507 = vadd.f32 %v318, %v506
        %v508 = vpop.f32.mrf.mxu0
        %509 = vmatprep.mubr.bf16.mxu0 0
        %510 = vmatmul.mubr.bf16.gmra.mxu0 %v411
        %v511 = vpop.f32.mrf.mxu0
        %v512 = vadd.f32 %v318, %v511
        %v513 = vpop.f32.mrf.mxu0
        %v514 = vpop.f32.mrf.mxu0
        %v515 = vadd.f32 %v318, %v514
        %v516 = vpop.f32.mrf.mxu0
        %517 = vmatprep.mubr.bf16.mxu0 0
        %518 = vmatmul.mubr.bf16.gmra.mxu0 %v414
        %v519 = vpop.f32.mrf.mxu0
        %v520 = vadd.f32 %v318, %v519
        %v521 = vpop.f32.mrf.mxu0
        %v522 = vpop.f32.mrf.mxu0
        %v523 = vadd.f32 %v318, %v522
        %v524 = vpop.f32.mrf.mxu0
        %525 = vmatprep.mubr.bf16.mxu0 0
        %526 = vmatmul.mubr.bf16.gmra.mxu0 %v417
        %v527 = vpop.f32.mrf.mxu0
        %v528 = vadd.f32 %v318, %v527
        %v529 = vpop.f32.mrf.mxu0
        %v530 = vpop.f32.mrf.mxu0
        %v531 = vadd.f32 %v318, %v530
        %v532 = vpop.f32.mrf.mxu0
        %533 = vmatprep.mubr.bf16.mxu0 0
        %534 = vmatmul.mubr.bf16.gmra.mxu0 %v420
        %v535 = vpop.f32.mrf.mxu0
        %v536 = vadd.f32 %v318, %v535
        %v537 = vpop.f32.mrf.mxu0
        %v538 = vpop.f32.mrf.mxu0
        %v539 = vadd.f32 %v318, %v538
        %v540 = vpop.f32.mrf.mxu0
        %541 = vmatprep.mubr.bf16.mxu0 0
        %542 = vmatmul.mubr.bf16.gmra.mxu0 %v423
        %v543 = vpop.f32.mrf.mxu0
        %v544 = vadd.f32 %v318, %v543
        %v545 = vpop.f32.mrf.mxu0
        %v546 = vpop.f32.mrf.mxu0
        %v547 = vadd.f32 %v318, %v546
        %v548 = vpop.f32.mrf.mxu0
        %549 = vmatprep.mubr.bf16.mxu0 0
        %550 = vmatmul.mubr.bf16.gmra.mxu0 %v426
        %v551 = vpop.f32.mrf.mxu0
        %v552 = vadd.f32 %v318, %v551
        %v553 = vpop.f32.mrf.mxu0
        %v554 = vpop.f32.mrf.mxu0
        %v555 = vadd.f32 %v318, %v554
        %v556 = vpop.f32.mrf.mxu0
        %557 = vmatprep.mubr.bf16.mxu0 0
        %558 = vmatmul.mubr.bf16.gmra.mxu0 %v429
        %v559 = vpop.f32.mrf.mxu0
        %v560 = vadd.f32 %v318, %v559
        %v561 = vpop.f32.mrf.mxu0
        %v562 = vpop.f32.mrf.mxu0
        %v563 = vadd.f32 %v318, %v562
        %v564 = vpop.f32.mrf.mxu0
        %565 = vmatprep.mubr.bf16.mxu0 0
        %566 = vmatmul.mubr.bf16.gmra.mxu0 %v432
        %v567 = vpop.f32.mrf.mxu0
        %v568 = vadd.f32 %v318, %v567
        %v569 = vpop.f32.mrf.mxu0
        %v570 = vpop.f32.mrf.mxu0
        %v571 = vadd.f32 %v318, %v570
        %v572 = vpop.f32.mrf.mxu0
        %573 = vmatprep.mubr.bf16.mxu0 0
        %574 = vmatmul.mubr.bf16.gmra.mxu0 %v435
        %v575 = vpop.f32.mrf.mxu0
        %v576 = vadd.f32 %v318, %v575
        %v577 = vpop.f32.mrf.mxu0
        %v578 = vpop.f32.mrf.mxu0
        %v579 = vadd.f32 %v318, %v578
        %v580 = vpop.f32.mrf.mxu0
        %581 = vmatprep.mubr.bf16.mxu0 0
        %582 = vmatmul.mubr.bf16.gmra.mxu0 %v438
        %v583 = vpop.f32.mrf.mxu0
        %v584 = vadd.f32 %v318, %v583
        %v585 = vpop.f32.mrf.mxu0
        %v586 = vpop.f32.mrf.mxu0
        %v587 = vadd.f32 %v318, %v586
        %v588 = vpop.f32.mrf.mxu0
        %589 = vmatprep.mubr.bf16.mxu0 0
        %590 = vmatmul.mubr.bf16.gmra.mxu0 %v441
        %v591 = vpop.f32.mrf.mxu0
        %v592 = vadd.f32 %v318, %v591
        %v593 = vpop.f32.mrf.mxu0
        %v594 = vpop.f32.mrf.mxu0
        %v595 = vadd.f32 %v318, %v594
        %v596 = vpop.f32.mrf.mxu0
        %597 = vmatprep.mubr.bf16.mxu0 0
        %598 = vmatmul.mubr.bf16.gmra.mxu0 %v444
        %v599 = vpop.f32.mrf.mxu0
        %v600 = vadd.f32 %v318, %v599
        %v601 = vpop.f32.mrf.mxu0
        %v602 = vpop.f32.mrf.mxu0
        %v603 = vadd.f32 %v318, %v602
        %v604 = vpop.f32.mrf.mxu0
        %605 = vmatprep.mubr.bf16.mxu0 0
        %606 = vmatmul.mubr.bf16.gmra.mxu0 %v447
        %v607 = vpop.f32.mrf.mxu0
        %v608 = vadd.f32 %v318, %v607
        %v609 = vpop.f32.mrf.mxu0
        %v610 = vpop.f32.mrf.mxu0
        %v611 = vadd.f32 %v318, %v610
        %v612 = vpop.f32.mrf.mxu0
        %613 = vdwg.mxu0
        %v614 = vmax.f32 %v488, 0.0
        %v615 = vmax.f32 %v491, 0.0
        %v616 = vmax.f32 %v496, 0.0
        %v617 = vmax.f32 %v499, 0.0
        %v618 = vmax.f32 %v504, 0.0
        %v619 = vmax.f32 %v507, 0.0
        %v620 = vmax.f32 %v512, 0.0
        %v621 = vmax.f32 %v515, 0.0
        %v622 = vmax.f32 %v520, 0.0
        %v623 = vmax.f32 %v523, 0.0
        %v624 = vmax.f32 %v528, 0.0
        %v625 = vmax.f32 %v531, 0.0
        %v626 = vmax.f32 %v536, 0.0
        %v627 = vmax.f32 %v539, 0.0
        %v628 = vmax.f32 %v544, 0.0
        %v629 = vmax.f32 %v547, 0.0
        %v630 = vmax.f32 %v552, 0.0
        %v631 = vmax.f32 %v555, 0.0
        %v632 = vmax.f32 %v560, 0.0
        %v633 = vmax.f32 %v563, 0.0
        %v634 = vmax.f32 %v568, 0.0
        %v635 = vmax.f32 %v571, 0.0
        %v636 = vmax.f32 %v576, 0.0
        %v637 = vmax.f32 %v579, 0.0
        %v638 = vmax.f32 %v584, 0.0
        %v639 = vmax.f32 %v587, 0.0
        %v640 = vmax.f32 %v592, 0.0
        %v641 = vmax.f32 %v595, 0.0
        %v642 = vmax.f32 %v600, 0.0
        %v643 = vmax.f32 %v603, 0.0
        %v644 = vmax.f32 %v608, 0.0
        %v645 = vmax.f32 %v611, 0.0
        %vm646 = vcmask 60416
        %647 = vst.msk [vmem:[#allocation2] sm:$0xf] %vm646, 0
        %648 = vst.msk [vmem:[#allocation2 + $0x4] sm:$0xf] %vm646, 0
        %v649 = vpack.c.bf16 %v615, %v614
        %v650 = vpack.c.bf16 %v617, %v616
        %v651 = vpack.c.bf16 %v619, %v618
        %v652 = vpack.c.bf16 %v621, %v620
        %v653 = vpack.c.bf16 %v623, %v622
        %v654 = vpack.c.bf16 %v625, %v624
        %v655 = vpack.c.bf16 %v627, %v626
        %v656 = vpack.c.bf16 %v629, %v628
        %v657 = vpack.c.bf16 %v631, %v630
        %v658 = vpack.c.bf16 %v633, %v632
        %v659 = vpack.c.bf16 %v635, %v634
        %v660 = vpack.c.bf16 %v637, %v636
        %v661 = vpack.c.bf16 %v639, %v638
        %v662 = vpack.c.bf16 %v641, %v640
        %v663 = vpack.c.bf16 %v643, %v642
        %v664 = vpack.c.bf16 %v645, %v644
        %v681 = vunpack.c.l.b16 %v649
        %v682 = vunpack.c.h.b16 %v649
        %v683 = vunpack.c.l.b16 %v650
        %v684 = vunpack.c.h.b16 %v650
        %v685 = vunpack.c.l.b16 %v651
        %v686 = vunpack.c.h.b16 %v651
        %v687 = vunpack.c.l.b16 %v652
        %v688 = vunpack.c.h.b16 %v652
        %v689 = vunpack.c.l.b16 %v653
        %v690 = vunpack.c.h.b16 %v653
        %v691 = vunpack.c.l.b16 %v654
        %v692 = vunpack.c.h.b16 %v654
        %v693 = vunpack.c.l.b16 %v655
        %v694 = vunpack.c.h.b16 %v655
        %v695 = vunpack.c.l.b16 %v656
        %v696 = vunpack.c.h.b16 %v656
        %v697 = vunpack.c.l.b16 %v657
        %v698 = vunpack.c.h.b16 %v657
        %v699 = vunpack.c.l.b16 %v658
        %v700 = vunpack.c.h.b16 %v658
        %v701 = vunpack.c.l.b16 %v659
        %v702 = vunpack.c.h.b16 %v659
        %v703 = vunpack.c.l.b16 %v660
        %v704 = vunpack.c.h.b16 %v660
        %v705 = vunpack.c.l.b16 %v661
        %v706 = vunpack.c.h.b16 %v661
        %v707 = vunpack.c.l.b16 %v662
        %v708 = vunpack.c.h.b16 %v662
        %v709 = vunpack.c.l.b16 %v663
        %v710 = vunpack.c.h.b16 %v663
        %v711 = vunpack.c.l.b16 %v664
        %v712 = vunpack.c.h.b16 %v664
        %v713 = vpack.c.b16 %v681, %v681
        %v714 = vpack.c.b16 %v682, %v682
        %v715 = vpack.c.b16 %v683, %v683
        %v716 = vpack.c.b16 %v684, %v684
        %v717 = vpack.c.b16 %v685, %v685
        %v718 = vpack.c.b16 %v686, %v686
        %v719 = vpack.c.b16 %v687, %v687
        %v720 = vpack.c.b16 %v688, %v688
        %v721 = vpack.c.b16 %v689, %v689
        %v722 = vpack.c.b16 %v690, %v690
        %v723 = vpack.c.b16 %v691, %v691
        %v724 = vpack.c.b16 %v692, %v692
        %v725 = vpack.c.b16 %v693, %v693
        %v726 = vpack.c.b16 %v694, %v694
        %v727 = vpack.c.b16 %v695, %v695
        %v728 = vpack.c.b16 %v696, %v696
        %v729 = vpack.c.b16 %v697, %v697
        %v730 = vpack.c.b16 %v698, %v698
        %v731 = vpack.c.b16 %v699, %v699
        %v732 = vpack.c.b16 %v700, %v700
        %v733 = vpack.c.b16 %v701, %v701
        %v734 = vpack.c.b16 %v702, %v702
        %v735 = vpack.c.b16 %v703, %v703
        %v736 = vpack.c.b16 %v704, %v704
        %v737 = vpack.c.b16 %v705, %v705
        %v738 = vpack.c.b16 %v706, %v706
        %v739 = vpack.c.b16 %v707, %v707
        %v740 = vpack.c.b16 %v708, %v708
        %v741 = vpack.c.b16 %v709, %v709
        %v742 = vpack.c.b16 %v710, %v710
        %v743 = vpack.c.b16 %v711, %v711
        %v744 = vpack.c.b16 %v712, %v712
        %777 = vst.msk [vmem:[#allocation2 + $0x8] sm:$0xf] %vm646, %v713
        %778 = vst.msk [vmem:[#allocation2 + $0xc] sm:$0xf] %vm646, %v714
        %779 = vst.msk [vmem:[#allocation2 + $0x10] sm:$0xf] %vm646, %v715
        %780 = vst.msk [vmem:[#allocation2 + $0x14] sm:$0xf] %vm646, %v716
        %781 = vst.msk [vmem:[#allocation2 + $0x18] sm:$0xf] %vm646, %v717
        %782 = vst.msk [vmem:[#allocation2 + $0x1c] sm:$0xf] %vm646, %v718
        %783 = vst.msk [vmem:[#allocation2 + $0x20] sm:$0xf] %vm646, %v719
        %784 = vst.msk [vmem:[#allocation2 + $0x24] sm:$0xf] %vm646, %v720
        %785 = vst.msk [vmem:[#allocation2 + $0x28] sm:$0xf] %vm646, %v721
        %786 = vst.msk [vmem:[#allocation2 + $0x2c] sm:$0xf] %vm646, %v722
        %787 = vst.msk [vmem:[#allocation2 + $0x30] sm:$0xf] %vm646, %v723
        %788 = vst.msk [vmem:[#allocation2 + $0x34] sm:$0xf] %vm646, %v724
        %789 = vst.msk [vmem:[#allocation2 + $0x38] sm:$0xf] %vm646, %v725
        %790 = vst.msk [vmem:[#allocation2 + $0x3c] sm:$0xf] %vm646, %v726
        %791 = vst.msk [vmem:[#allocation2 + $0x40] sm:$0xf] %vm646, %v727
        %792 = vst.msk [vmem:[#allocation2 + $0x44] sm:$0xf] %vm646, %v728
        %793 = vst.msk [vmem:[#allocation2 + $0x48] sm:$0xf] %vm646, %v729
        %794 = vst.msk [vmem:[#allocation2 + $0x4c] sm:$0xf] %vm646, %v730
        %795 = vst.msk [vmem:[#allocation2 + $0x50] sm:$0xf] %vm646, %v731
        %796 = vst.msk [vmem:[#allocation2 + $0x54] sm:$0xf] %vm646, %v732
        %797 = vst.msk [vmem:[#allocation2 + $0x58] sm:$0xf] %vm646, %v733
        %798 = vst.msk [vmem:[#allocation2 + $0x5c] sm:$0xf] %vm646, %v734
        %799 = vst.msk [vmem:[#allocation2 + $0x60] sm:$0xf] %vm646, %v735
        %800 = vst.msk [vmem:[#allocation2 + $0x64] sm:$0xf] %vm646, %v736
        %801 = vst.msk [vmem:[#allocation2 + $0x68] sm:$0xf] %vm646, %v737
        %802 = vst.msk [vmem:[#allocation2 + $0x6c] sm:$0xf] %vm646, %v738
        %803 = vst.msk [vmem:[#allocation2 + $0x70] sm:$0xf] %vm646, %v739
        %804 = vst.msk [vmem:[#allocation2 + $0x74] sm:$0xf] %vm646, %v740
        %805 = vst.msk [vmem:[#allocation2 + $0x78] sm:$0xf] %vm646, %v741
        %806 = vst.msk [vmem:[#allocation2 + $0x7c] sm:$0xf] %vm646, %v742
        %807 = vst.msk [vmem:[#allocation2 + $0x80] sm:$0xf] %vm646, %v743
        %808 = vst.msk [vmem:[#allocation2 + $0x84] sm:$0xf] %vm646, %v744
        %809 = vst.msk [vmem:[#allocation2 + $0x88] sm:$0xf] %vm646, 0
        %810 = vst.msk [vmem:[#allocation2 + $0x8c] sm:$0xf] %vm646, 0
      $region48: #{tpu_custom_call.1} parent=43 // pred_fallthru
        _
      %s811 = smul.u32 %s22, 128
      %s812 = sshra.s32 %s811, 3
      %s813 = sand.u32 %s811, 7
      %s814 = smul.addr %s812, 4
      %s815 = scalar_lea.vmem [#allocation2], %s814
      %v816 = vld [vmem:[%s815] sm:$0xf]
      %v817 = vld [vmem:[%s815 + $0x4] sm:$0xf]
      %v818 = vld [vmem:[%s815 + $0x8] sm:$0xf]
      %v819 = vld [vmem:[%s815 + $0xc] sm:$0xf]
      %v820 = vld [vmem:[%s815 + $0x10] sm:$0xf]
      %v821 = vld [vmem:[%s815 + $0x14] sm:$0xf]
      %v822 = vld [vmem:[%s815 + $0x18] sm:$0xf]
      %v823 = vld [vmem:[%s815 + $0x1c] sm:$0xf]
      %v824 = vld [vmem:[%s815 + $0x20] sm:$0xf]
      %v825 = vld [vmem:[%s815 + $0x24] sm:$0xf]
      %v826 = vld [vmem:[%s815 + $0x28] sm:$0xf]
      %v827 = vld [vmem:[%s815 + $0x2c] sm:$0xf]
      %v828 = vld [vmem:[%s815 + $0x30] sm:$0xf]
      %v829 = vld [vmem:[%s815 + $0x34] sm:$0xf]
      %v830 = vld [vmem:[%s815 + $0x38] sm:$0xf]
      %v831 = vld [vmem:[%s815 + $0x3c] sm:$0xf]
      %v832 = vld [vmem:[%s815 + $0x40] sm:$0xf]
      %v833 = vld [vmem:[%s815 + $0x44] sm:$0xf]
      %v834 = vld [vmem:[%s815 + $0x48] sm:$0xf]
      %v835 = vld [vmem:[%s815 + $0x4c] sm:$0xf]
      %v836 = vlaneseq
      %v837 = vshrl.u32 %v836, 7
      %v838 = vadd.s32 %v837, 8
      %v839 = vadd.s32 %v837, 16
      %v840 = vadd.s32 %v837, 24
      %v841 = vadd.s32 %v837, 32
      %v842 = vadd.s32 %v837, 40
      %v843 = vadd.s32 %v837, 48
      %v844 = vadd.s32 %v837, 56
      %v845 = vadd.s32 %v837, 64
      %v846 = vadd.s32 %v837, 72
      %v847 = vadd.s32 %v837, 80
      %v848 = vadd.s32 %v837, 88
      %v849 = vadd.s32 %v837, 96
      %v850 = vadd.s32 %v837, 104
      %v851 = vadd.s32 %v837, 112
      %v852 = vadd.s32 %v837, 120
      %v853 = vadd.s32 %v837, 128
      %v854 = vadd.s32 %v837, 136
      %v855 = vadd.s32 %v837, 144
      %v856 = vadd.s32 %v837, 152
      %vm857 = vcmp.lt.s32.totalorder %v837, 0
      %v858 = vsub.s32 0, %v837
      %v859 = vsel %vm857, %v858, %v837
      %v860 = vshrl.u32 %v859, 4
      %v861 = vand.u32 %v859, 15
      %v862 = vsub.s32 0, %v861
      %v863 = vsel %vm857, %v862, %v861
      %vm864 = vcmp.lt.s32.totalorder %v838, 0
      %v865 = vsub.s32 0, %v838
      %v866 = vsel %vm864, %v865, %v838
      %v867 = vshrl.u32 %v866, 4
      %v868 = vand.u32 %v866, 15
      %v869 = vsub.s32 0, %v868
      %v870 = vsel %vm864, %v869, %v868
      %vm871 = vcmp.lt.s32.totalorder %v839, 0
      %v872 = vsub.s32 0, %v839
      %v873 = vsel %vm871, %v872, %v839
      %v874 = vshrl.u32 %v873, 4
      %v875 = vand.u32 %v873, 15
      %v876 = vsub.s32 0, %v875
      %v877 = vsel %vm871, %v876, %v875
      %vm878 = vcmp.lt.s32.totalorder %v840, 0
      %v879 = vsub.s32 0, %v840
      %v880 = vsel %vm878, %v879, %v840
      %v881 = vshrl.u32 %v880, 4
      %v882 = vand.u32 %v880, 15
      %v883 = vsub.s32 0, %v882
      %v884 = vsel %vm878, %v883, %v882
      %vm885 = vcmp.lt.s32.totalorder %v841, 0
      %v886 = vsub.s32 0, %v841
      %v887 = vsel %vm885, %v886, %v841
      %v888 = vshrl.u32 %v887, 4
      %v889 = vand.u32 %v887, 15
      %v890 = vsub.s32 0, %v889
      %v891 = vsel %vm885, %v890, %v889
      %vm892 = vcmp.lt.s32.totalorder %v842, 0
      %v893 = vsub.s32 0, %v842
      %v894 = vsel %vm892, %v893, %v842
      %v895 = vshrl.u32 %v894, 4
      %v896 = vand.u32 %v894, 15
      %v897 = vsub.s32 0, %v896
      %v898 = vsel %vm892, %v897, %v896
      %vm899 = vcmp.lt.s32.totalorder %v843, 0
      %v900 = vsub.s32 0, %v843
      %v901 = vsel %vm899, %v900, %v843
      %v902 = vshrl.u32 %v901, 4
      %v903 = vand.u32 %v901, 15
      %v904 = vsub.s32 0, %v903
      %v905 = vsel %vm899, %v904, %v903
      %vm906 = vcmp.lt.s32.totalorder %v844, 0
      %v907 = vsub.s32 0, %v844
      %v908 = vsel %vm906, %v907, %v844
      %v909 = vshrl.u32 %v908, 4
      %v910 = vand.u32 %v908, 15
      %v911 = vsub.s32 0, %v910
      %v912 = vsel %vm906, %v911, %v910
      %vm913 = vcmp.lt.s32.totalorder %v845, 0
      %v914 = vsub.s32 0, %v845
      %v915 = vsel %vm913, %v914, %v845
      %v916 = vshrl.u32 %v915, 4
      %v917 = vand.u32 %v915, 15
      %v918 = vsub.s32 0, %v917
      %v919 = vsel %vm913, %v918, %v917
      %vm920 = vcmp.lt.s32.totalorder %v846, 0
      %v921 = vsub.s32 0, %v846
      %v922 = vsel %vm920, %v921, %v846
      %v923 = vshrl.u32 %v922, 4
      %v924 = vand.u32 %v922, 15
      %v925 = vsub.s32 0, %v924
      %v926 = vsel %vm920, %v925, %v924
      %vm927 = vcmp.lt.s32.totalorder %v847, 0
      %v928 = vsub.s32 0, %v847
      %v929 = vsel %vm927, %v928, %v847
      %v930 = vshrl.u32 %v929, 4
      %v931 = vand.u32 %v929, 15
      %v932 = vsub.s32 0, %v931
      %v933 = vsel %vm927, %v932, %v931
      %vm934 = vcmp.lt.s32.totalorder %v848, 0
      %v935 = vsub.s32 0, %v848
      %v936 = vsel %vm934, %v935, %v848
      %v937 = vshrl.u32 %v936, 4
      %v938 = vand.u32 %v936, 15
      %v939 = vsub.s32 0, %v938
      %v940 = vsel %vm934, %v939, %v938
      %vm941 = vcmp.lt.s32.totalorder %v849, 0
      %v942 = vsub.s32 0, %v849
      %v943 = vsel %vm941, %v942, %v849
      %v944 = vshrl.u32 %v943, 4
      %v945 = vand.u32 %v943, 15
      %v946 = vsub.s32 0, %v945
      %v947 = vsel %vm941, %v946, %v945
      %vm948 = vcmp.lt.s32.totalorder %v850, 0
      %v949 = vsub.s32 0, %v850
      %v950 = vsel %vm948, %v949, %v850
      %v951 = vshrl.u32 %v950, 4
      %v952 = vand.u32 %v950, 15
      %v953 = vsub.s32 0, %v952
      %v954 = vsel %vm948, %v953, %v952
      %vm955 = vcmp.lt.s32.totalorder %v851, 0
      %v956 = vsub.s32 0, %v851
      %v957 = vsel %vm955, %v956, %v851
      %v958 = vshrl.u32 %v957, 4
      %v959 = vand.u32 %v957, 15
      %v960 = vsub.s32 0, %v959
      %v961 = vsel %vm955, %v960, %v959
      %vm962 = vcmp.lt.s32.totalorder %v852, 0
      %v963 = vsub.s32 0, %v852
      %v964 = vsel %vm962, %v963, %v852
      %v965 = vshrl.u32 %v964, 4
      %v966 = vand.u32 %v964, 15
      %v967 = vsub.s32 0, %v966
      %v968 = vsel %vm962, %v967, %v966
      %vm969 = vcmp.lt.s32.totalorder %v853, 0
      %v970 = vsub.s32 0, %v853
      %v971 = vsel %vm969, %v970, %v853
      %v972 = vshrl.u32 %v971, 4
      %v973 = vand.u32 %v971, 15
      %v974 = vsub.s32 0, %v973
      %v975 = vsel %vm969, %v974, %v973
      %vm976 = vcmp.lt.s32.totalorder %v854, 0
      %v977 = vsub.s32 0, %v854
      %v978 = vsel %vm976, %v977, %v854
      %v979 = vshrl.u32 %v978, 4
      %v980 = vand.u32 %v978, 15
      %v981 = vsub.s32 0, %v980
      %v982 = vsel %vm976, %v981, %v980
      %vm983 = vcmp.lt.s32.totalorder %v855, 0
      %v984 = vsub.s32 0, %v855
      %v985 = vsel %vm983, %v984, %v855
      %v986 = vshrl.u32 %v985, 4
      %v987 = vand.u32 %v985, 15
      %v988 = vsub.s32 0, %v987
      %v989 = vsel %vm983, %v988, %v987
      %vm990 = vcmp.lt.s32.totalorder %v856, 0
      %v991 = vsub.s32 0, %v856
      %v992 = vsel %vm990, %v991, %v856
      %v993 = vshrl.u32 %v992, 4
      %v994 = vand.u32 %v992, 15
      %v995 = vsub.s32 0, %v994
      %v996 = vsel %vm990, %v995, %v994
      %vm997 = vcmp.ne.s32.totalorder %v863, 0
      %vm998 = vcmp.ne.s32.totalorder %v870, 0
      %vm999 = vcmp.ne.s32.totalorder %v877, 0
      %vm1000 = vcmp.ne.s32.totalorder %v884, 0
      %vm1001 = vcmp.ne.s32.totalorder %v891, 0
      %vm1002 = vcmp.ne.s32.totalorder %v898, 0
      %vm1003 = vcmp.ne.s32.totalorder %v905, 0
      %vm1004 = vcmp.ne.s32.totalorder %v912, 0
      %vm1005 = vcmp.ne.s32.totalorder %v919, 0
      %vm1006 = vcmp.ne.s32.totalorder %v926, 0
      %vm1007 = vcmp.ne.s32.totalorder %v933, 0
      %vm1008 = vcmp.ne.s32.totalorder %v940, 0
      %vm1009 = vcmp.ne.s32.totalorder %v947, 0
      %vm1010 = vcmp.ne.s32.totalorder %v954, 0
      %vm1011 = vcmp.ne.s32.totalorder %v961, 0
      %vm1012 = vcmp.ne.s32.totalorder %v968, 0
      %vm1013 = vcmp.ne.s32.totalorder %v975, 0
      %vm1014 = vcmp.ne.s32.totalorder %v982, 0
      %vm1015 = vcmp.ne.s32.totalorder %v989, 0
      %vm1016 = vcmp.ne.s32.totalorder %v996, 0
      %vm1017 = vcmp.lt.s32.totalorder %v863, 0
      %vm1018 = vcmp.lt.s32.totalorder %v870, 0
      %vm1019 = vcmp.lt.s32.totalorder %v877, 0
      %vm1020 = vcmp.lt.s32.totalorder %v884, 0
      %vm1021 = vcmp.lt.s32.totalorder %v891, 0
      %vm1022 = vcmp.lt.s32.totalorder %v898, 0
      %vm1023 = vcmp.lt.s32.totalorder %v905, 0
      %vm1024 = vcmp.lt.s32.totalorder %v912, 0
      %vm1025 = vcmp.lt.s32.totalorder %v919, 0
      %vm1026 = vcmp.lt.s32.totalorder %v926, 0
      %vm1027 = vcmp.lt.s32.totalorder %v933, 0
      %vm1028 = vcmp.lt.s32.totalorder %v940, 0
      %vm1029 = vcmp.lt.s32.totalorder %v947, 0
      %vm1030 = vcmp.lt.s32.totalorder %v954, 0
      %vm1031 = vcmp.lt.s32.totalorder %v961, 0
      %vm1032 = vcmp.lt.s32.totalorder %v968, 0
      %vm1033 = vcmp.lt.s32.totalorder %v975, 0
      %vm1034 = vcmp.lt.s32.totalorder %v982, 0
      %vm1035 = vcmp.lt.s32.totalorder %v989, 0
      %vm1036 = vcmp.lt.s32.totalorder %v996, 0
      %vm1037 = vmand %vm1017, %vm997
      %vm1038 = vmand %vm1018, %vm998
      %vm1039 = vmand %vm1019, %vm999
      %vm1040 = vmand %vm1020, %vm1000
      %vm1041 = vmand %vm1021, %vm1001
      %vm1042 = vmand %vm1022, %vm1002
      %vm1043 = vmand %vm1023, %vm1003
      %vm1044 = vmand %vm1024, %vm1004
      %vm1045 = vmand %vm1025, %vm1005
      %vm1046 = vmand %vm1026, %vm1006
      %vm1047 = vmand %vm1027, %vm1007
      %vm1048 = vmand %vm1028, %vm1008
      %vm1049 = vmand %vm1029, %vm1009
      %vm1050 = vmand %vm1030, %vm1010
      %vm1051 = vmand %vm1031, %vm1011
      %vm1052 = vmand %vm1032, %vm1012
      %vm1053 = vmand %vm1033, %vm1013
      %vm1054 = vmand %vm1034, %vm1014
      %vm1055 = vmand %vm1035, %vm1015
      %vm1056 = vmand %vm1036, %vm1016
      %v1057 = vadd.s32 %v863, 16
      %v1058 = vadd.s32 %v870, 16
      %v1059 = vadd.s32 %v877, 16
      %v1060 = vadd.s32 %v884, 16
      %v1061 = vadd.s32 %v891, 16
      %v1062 = vadd.s32 %v898, 16
      %v1063 = vadd.s32 %v905, 16
      %v1064 = vadd.s32 %v912, 16
      %v1065 = vadd.s32 %v919, 16
      %v1066 = vadd.s32 %v926, 16
      %v1067 = vadd.s32 %v933, 16
      %v1068 = vadd.s32 %v940, 16
      %v1069 = vadd.s32 %v947, 16
      %v1070 = vadd.s32 %v954, 16
      %v1071 = vadd.s32 %v961, 16
      %v1072 = vadd.s32 %v968, 16
      %v1073 = vadd.s32 %v975, 16
      %v1074 = vadd.s32 %v982, 16
      %v1075 = vadd.s32 %v989, 16
      %v1076 = vadd.s32 %v996, 16
      %v1077 = vsel %vm1037, %v1057, %v863
      %v1078 = vsel %vm1038, %v1058, %v870
      %v1079 = vsel %vm1039, %v1059, %v877
      %v1080 = vsel %vm1040, %v1060, %v884
      %v1081 = vsel %vm1041, %v1061, %v891
      %v1082 = vsel %vm1042, %v1062, %v898
      %v1083 = vsel %vm1043, %v1063, %v905
      %v1084 = vsel %vm1044, %v1064, %v912
      %v1085 = vsel %vm1045, %v1065, %v919
      %v1086 = vsel %vm1046, %v1066, %v926
      %v1087 = vsel %vm1047, %v1067, %v933
      %v1088 = vsel %vm1048, %v1068, %v940
      %v1089 = vsel %vm1049, %v1069, %v947
      %v1090 = vsel %vm1050, %v1070, %v954
      %v1091 = vsel %vm1051, %v1071, %v961
      %v1092 = vsel %vm1052, %v1072, %v968
      %v1093 = vsel %vm1053, %v1073, %v975
      %v1094 = vsel %vm1054, %v1074, %v982
      %v1095 = vsel %vm1055, %v1075, %v989
      %v1096 = vsel %vm1056, %v1076, %v996
      %vm1097 = vcmp.eq.s32.totalorder %v1077, 0
      %vm1098 = vcmp.eq.s32.totalorder %v1078, 0
      %vm1099 = vcmp.eq.s32.totalorder %v1079, 0
      %vm1100 = vcmp.eq.s32.totalorder %v1080, 0
      %vm1101 = vcmp.eq.s32.totalorder %v1081, 0
      %vm1102 = vcmp.eq.s32.totalorder %v1082, 0
      %vm1103 = vcmp.eq.s32.totalorder %v1083, 0
      %vm1104 = vcmp.eq.s32.totalorder %v1084, 0
      %vm1105 = vcmp.eq.s32.totalorder %v1085, 0
      %vm1106 = vcmp.eq.s32.totalorder %v1086, 0
      %vm1107 = vcmp.eq.s32.totalorder %v1087, 0
      %vm1108 = vcmp.eq.s32.totalorder %v1088, 0
      %vm1109 = vcmp.eq.s32.totalorder %v1089, 0
      %vm1110 = vcmp.eq.s32.totalorder %v1090, 0
      %vm1111 = vcmp.eq.s32.totalorder %v1091, 0
      %vm1112 = vcmp.eq.s32.totalorder %v1092, 0
      %vm1113 = vcmp.eq.s32.totalorder %v1093, 0
      %vm1114 = vcmp.eq.s32.totalorder %v1094, 0
      %vm1115 = vcmp.eq.s32.totalorder %v1095, 0
      %vm1116 = vcmp.eq.s32.totalorder %v1096, 0
      %vm1117 = vmpackc.low %vm1097, %vm1097
      %vm1118 = vmpackc.low %vm1098, %vm1098
      %vm1119 = vmpackc.low %vm1099, %vm1099
      %vm1120 = vmpackc.low %vm1100, %vm1100
      %vm1121 = vmpackc.low %vm1101, %vm1101
      %vm1122 = vmpackc.low %vm1102, %vm1102
      %vm1123 = vmpackc.low %vm1103, %vm1103
      %vm1124 = vmpackc.low %vm1104, %vm1104
      %vm1125 = vmpackc.low %vm1105, %vm1105
      %vm1126 = vmpackc.low %vm1106, %vm1106
      %vm1127 = vmpackc.low %vm1107, %vm1107
      %vm1128 = vmpackc.low %vm1108, %vm1108
      %vm1129 = vmpackc.low %vm1109, %vm1109
      %vm1130 = vmpackc.low %vm1110, %vm1110
      %vm1131 = vmpackc.low %vm1111, %vm1111
      %vm1132 = vmpackc.low %vm1112, %vm1112
      %vm1133 = vmpackc.low %vm1113, %vm1113
      %vm1134 = vmpackc.low %vm1114, %vm1114
      %vm1135 = vmpackc.low %vm1115, %vm1115
      %vm1136 = vmpackc.low %vm1116, %vm1116
      %v1137 = vsel %vm1117, 0, %v816
      %v1138 = vsel %vm1118, 0, %v817
      %v1139 = vsel %vm1119, 0, %v818
      %v1140 = vsel %vm1120, 0, %v819
      %v1141 = vsel %vm1121, 0, %v820
      %v1142 = vsel %vm1122, 0, %v821
      %v1143 = vsel %vm1123, 0, %v822
      %v1144 = vsel %vm1124, 0, %v823
      %v1145 = vsel %vm1125, 0, %v824
      %v1146 = vsel %vm1126, 0, %v825
      %v1147 = vsel %vm1127, 0, %v826
      %v1148 = vsel %vm1128, 0, %v827
      %v1149 = vsel %vm1129, 0, %v828
      %v1150 = vsel %vm1130, 0, %v829
      %v1151 = vsel %vm1131, 0, %v830
      %v1152 = vsel %vm1132, 0, %v831
      %v1153 = vsel %vm1133, 0, %v832
      %v1154 = vsel %vm1134, 0, %v833
      %v1155 = vsel %vm1135, 0, %v834
      %v1156 = vsel %vm1136, 0, %v835
      %vm1157 = vcmp.eq.s32.totalorder %v1077, 15
      %vm1158 = vcmp.eq.s32.totalorder %v1078, 15
      %vm1159 = vcmp.eq.s32.totalorder %v1079, 15
      %vm1160 = vcmp.eq.s32.totalorder %v1080, 15
      %vm1161 = vcmp.eq.s32.totalorder %v1081, 15
      %vm1162 = vcmp.eq.s32.totalorder %v1082, 15
      %vm1163 = vcmp.eq.s32.totalorder %v1083, 15
      %vm1164 = vcmp.eq.s32.totalorder %v1084, 15
      %vm1165 = vcmp.eq.s32.totalorder %v1085, 15
      %vm1166 = vcmp.eq.s32.totalorder %v1086, 15
      %vm1167 = vcmp.eq.s32.totalorder %v1087, 15
      %vm1168 = vcmp.eq.s32.totalorder %v1088, 15
      %vm1169 = vcmp.eq.s32.totalorder %v1089, 15
      %vm1170 = vcmp.eq.s32.totalorder %v1090, 15
      %vm1171 = vcmp.eq.s32.totalorder %v1091, 15
      %vm1172 = vcmp.eq.s32.totalorder %v1092, 15
      %vm1173 = vcmp.eq.s32.totalorder %v1093, 15
      %vm1174 = vcmp.eq.s32.totalorder %v1094, 15
      %vm1175 = vcmp.eq.s32.totalorder %v1095, 15
      %vm1176 = vcmp.eq.s32.totalorder %v1096, 15
      %vm1177 = vmpackc.low %vm1157, %vm1157
      %vm1178 = vmpackc.low %vm1158, %vm1158
      %vm1179 = vmpackc.low %vm1159, %vm1159
      %vm1180 = vmpackc.low %vm1160, %vm1160
      %vm1181 = vmpackc.low %vm1161, %vm1161
      %vm1182 = vmpackc.low %vm1162, %vm1162
      %vm1183 = vmpackc.low %vm1163, %vm1163
      %vm1184 = vmpackc.low %vm1164, %vm1164
      %vm1185 = vmpackc.low %vm1165, %vm1165
      %vm1186 = vmpackc.low %vm1166, %vm1166
      %vm1187 = vmpackc.low %vm1167, %vm1167
      %vm1188 = vmpackc.low %vm1168, %vm1168
      %vm1189 = vmpackc.low %vm1169, %vm1169
      %vm1190 = vmpackc.low %vm1170, %vm1170
      %vm1191 = vmpackc.low %vm1171, %vm1171
      %vm1192 = vmpackc.low %vm1172, %vm1172
      %vm1193 = vmpackc.low %vm1173, %vm1173
      %vm1194 = vmpackc.low %vm1174, %vm1174
      %vm1195 = vmpackc.low %vm1175, %vm1175
      %vm1196 = vmpackc.low %vm1176, %vm1176
      %v1197 = vsel %vm1177, 0, %v816
      %v1198 = vsel %vm1178, 0, %v817
      %v1199 = vsel %vm1179, 0, %v818
      %v1200 = vsel %vm1180, 0, %v819
      %v1201 = vsel %vm1181, 0, %v820
      %v1202 = vsel %vm1182, 0, %v821
      %v1203 = vsel %vm1183, 0, %v822
      %v1204 = vsel %vm1184, 0, %v823
      %v1205 = vsel %vm1185, 0, %v824
      %v1206 = vsel %vm1186, 0, %v825
      %v1207 = vsel %vm1187, 0, %v826
      %v1208 = vsel %vm1188, 0, %v827
      %v1209 = vsel %vm1189, 0, %v828
      %v1210 = vsel %vm1190, 0, %v829
      %v1211 = vsel %vm1191, 0, %v830
      %v1212 = vsel %vm1192, 0, %v831
      %v1213 = vsel %vm1193, 0, %v832
      %v1214 = vsel %vm1194, 0, %v833
      %v1215 = vsel %vm1195, 0, %v834
      %v1216 = vsel %vm1196, 0, %v835
      %v1217 = vld [vmem:[%s3] sm:$0xf]
      %v1218 = vld [vmem:[%s4] sm:$0x1]
      %v1220 = vlaneseq
      %v1221 = vshrl.u32 %v1220, 7
      %v1222 = vsub.s32 0, %v1221
      %v1223 = vrot.slane %v1218, %v1222
      %v1241 = vunpack.c.l.b16 %v818
      %v1242 = vunpack.c.l.b16 %v819
      %v1243 = vunpack.c.l.b16 %v820
      %v1244 = vunpack.c.l.b16 %v821
      %v1245 = vunpack.c.l.b16 %v822
      %v1246 = vunpack.c.l.b16 %v823
      %v1247 = vunpack.c.l.b16 %v824
      %v1248 = vunpack.c.l.b16 %v825
      %v1249 = vunpack.c.l.b16 %v826
      %v1250 = vunpack.c.l.b16 %v827
      %v1251 = vunpack.c.l.b16 %v828
      %v1252 = vunpack.c.l.b16 %v829
      %v1253 = vunpack.c.l.b16 %v830
      %v1254 = vunpack.c.l.b16 %v831
      %v1255 = vunpack.c.l.b16 %v832
      %v1256 = vunpack.c.l.b16 %v833
      %v1257 = vpack.c.b16 %v1242, %v1241
      %v1258 = vpack.c.b16 %v1244, %v1243
      %v1259 = vpack.c.b16 %v1246, %v1245
      %v1260 = vpack.c.b16 %v1248, %v1247
      %v1261 = vpack.c.b16 %v1250, %v1249
      %v1262 = vpack.c.b16 %v1252, %v1251
      %v1263 = vpack.c.b16 %v1254, %v1253
      %v1264 = vpack.c.b16 %v1256, %v1255
      %vm1265 = vcmask 64512
      %v1267 = vsel %vm1265, %v1257, 0
      %v1270 = vsel %vm1265, %v1258, 0
      %v1273 = vsel %vm1265, %v1259, 0
      %v1276 = vsel %vm1265, %v1260, 0
      %v1279 = vsel %vm1265, %v1261, 0
      %v1282 = vsel %vm1265, %v1262, 0
      %v1285 = vsel %vm1265, %v1263, 0
      %v1288 = vsel %vm1265, %v1264, 0
      %vm1290 = vcmask 1043456
      %v1292 = vsel %vm1290, %v1217, 0
      %1294 = vmatprep.subr.bf16.mxu0 0
      %1295 = vmatpush1.bf16.msra.mxu0 0
      %1296 = vmatprep.subr.bf16.mxu0 0
      %1297 = vmatpush1.bf16.msra.mxu0 0
      %1298 = vmatprep.subr.bf16.mxu0 0
      %1299 = vmatpush1.bf16.msra.mxu0 0
      %1300 = vmatprep.subr.bf16.mxu0 0
      %1301 = vmatpush1.bf16.msra.mxu0 0
      %1302 = vmatprep.subr.bf16.mxu0 0
      %1303 = vmatpush1.bf16.msra.mxu0 0
      %1304 = vmatprep.subr.bf16.mxu0 0
      %1305 = vmatpush1.bf16.msra.mxu0 0
      %1306 = vmatprep.subr.bf16.mxu0 0
      %1307 = vmatpush1.bf16.msra.mxu0 0
      %1308 = vmatprep.subr.bf16.mxu0 0
      %1309 = vmatpush1.bf16.msra.mxu0 %v1292
      %1310 = vmatprep.subr.bf16.mxu0 0
      %1311 = vmatpush2.bf16.msra.mxu0 0
      %1312 = vmatprep.subr.bf16.mxu0 0
      %1313 = vmatpush2.bf16.msra.mxu0 0
      %1314 = vmatprep.subr.bf16.mxu0 0
      %1315 = vmatpush2.bf16.msra.mxu0 0
      %1316 = vmatprep.subr.bf16.mxu0 0
      %1317 = vmatpush2.bf16.msra.mxu0 0
      %1318 = vmatprep.subr.bf16.mxu0 0
      %1319 = vmatpush2.bf16.msra.mxu0 0
      %1320 = vmatprep.subr.bf16.mxu0 0
      %1321 = vmatpush2.bf16.msra.mxu0 0
      %1322 = vmatprep.subr.bf16.mxu0 0
      %1323 = vmatpush2.bf16.msra.mxu0 0
      %1324 = vmatprep.subr.bf16.mxu0 0
      %1325 = vmatpush2.bf16.msra.mxu0 0
      %1326 = vmatprep.mubr.bf16.mxu0 0
      %1327 = vmatmul.mubr.bf16.gmra.mxu0 %v1267
      %v1328 = vpop.f32.mrf.mxu0
      %v1329 = vadd.f32 %v1223, %v1328
      %v1330 = vpop.f32.mrf.mxu0
      %v1331 = vpop.f32.mrf.mxu0
      %v1332 = vadd.f32 %v1223, %v1331
      %v1333 = vpop.f32.mrf.mxu0
      %1334 = vmatprep.mubr.bf16.mxu0 0
      %1335 = vmatmul.mubr.bf16.gmra.mxu0 %v1270
      %v1336 = vpop.f32.mrf.mxu0
      %v1337 = vadd.f32 %v1223, %v1336
      %v1338 = vpop.f32.mrf.mxu0
      %v1339 = vpop.f32.mrf.mxu0
      %v1340 = vadd.f32 %v1223, %v1339
      %v1341 = vpop.f32.mrf.mxu0
      %1342 = vmatprep.mubr.bf16.mxu0 0
      %1343 = vmatmul.mubr.bf16.gmra.mxu0 %v1273
      %v1344 = vpop.f32.mrf.mxu0
      %v1345 = vadd.f32 %v1223, %v1344
      %v1346 = vpop.f32.mrf.mxu0
      %v1347 = vpop.f32.mrf.mxu0
      %v1348 = vadd.f32 %v1223, %v1347
      %v1349 = vpop.f32.mrf.mxu0
      %1350 = vmatprep.mubr.bf16.mxu0 0
      %1351 = vmatmul.mubr.bf16.gmra.mxu0 %v1276
      %v1352 = vpop.f32.mrf.mxu0
      %v1353 = vadd.f32 %v1223, %v1352
      %v1354 = vpop.f32.mrf.mxu0
      %v1355 = vpop.f32.mrf.mxu0
      %v1356 = vadd.f32 %v1223, %v1355
      %v1357 = vpop.f32.mrf.mxu0
      %1358 = vmatprep.mubr.bf16.mxu0 0
      %1359 = vmatmul.mubr.bf16.gmra.mxu0 %v1279
      %v1360 = vpop.f32.mrf.mxu0
      %v1361 = vadd.f32 %v1223, %v1360
      %v1362 = vpop.f32.mrf.mxu0
      %v1363 = vpop.f32.mrf.mxu0
      %v1364 = vadd.f32 %v1223, %v1363
      %v1365 = vpop.f32.mrf.mxu0
      %1366 = vmatprep.mubr.bf16.mxu0 0
      %1367 = vmatmul.mubr.bf16.gmra.mxu0 %v1282
      %v1368 = vpop.f32.mrf.mxu0
      %v1369 = vadd.f32 %v1223, %v1368
      %v1370 = vpop.f32.mrf.mxu0
      %v1371 = vpop.f32.mrf.mxu0
      %v1372 = vadd.f32 %v1223, %v1371
      %v1373 = vpop.f32.mrf.mxu0
      %1374 = vmatprep.mubr.bf16.mxu0 0
      %1375 = vmatmul.mubr.bf16.gmra.mxu0 %v1285
      %v1376 = vpop.f32.mrf.mxu0
      %v1377 = vadd.f32 %v1223, %v1376
      %v1378 = vpop.f32.mrf.mxu0
      %v1379 = vpop.f32.mrf.mxu0
      %v1380 = vadd.f32 %v1223, %v1379
      %v1381 = vpop.f32.mrf.mxu0
      %1382 = vmatprep.mubr.bf16.mxu0 0
      %1383 = vmatmul.mubr.bf16.gmra.mxu0 %v1288
      %v1384 = vpop.f32.mrf.mxu0
      %v1385 = vadd.f32 %v1223, %v1384
      %v1386 = vpop.f32.mrf.mxu0
      %v1387 = vpop.f32.mrf.mxu0
      %v1388 = vadd.f32 %v1223, %v1387
      %v1389 = vpop.f32.mrf.mxu0
      %1390 = vdwg.mxu0
      %v1407 = vunpack.c.l.b16 %v1197
      %v1408 = vunpack.c.l.b16 %v1198
      %v1409 = vunpack.c.l.b16 %v1199
      %v1410 = vunpack.c.l.b16 %v1200
      %v1411 = vunpack.c.l.b16 %v1201
      %v1412 = vunpack.c.l.b16 %v1202
      %v1413 = vunpack.c.l.b16 %v1203
      %v1414 = vunpack.c.l.b16 %v1204
      %v1415 = vunpack.c.l.b16 %v1205
      %v1416 = vunpack.c.l.b16 %v1206
      %v1417 = vunpack.c.l.b16 %v1207
      %v1418 = vunpack.c.l.b16 %v1208
      %v1419 = vunpack.c.l.b16 %v1209
      %v1420 = vunpack.c.l.b16 %v1210
      %v1421 = vunpack.c.l.b16 %v1211
      %v1422 = vunpack.c.l.b16 %v1212
      %v1423 = vpack.c.b16 %v1408, %v1407
      %v1424 = vpack.c.b16 %v1410, %v1409
      %v1425 = vpack.c.b16 %v1412, %v1411
      %v1426 = vpack.c.b16 %v1414, %v1413
      %v1427 = vpack.c.b16 %v1416, %v1415
      %v1428 = vpack.c.b16 %v1418, %v1417
      %v1429 = vpack.c.b16 %v1420, %v1419
      %v1430 = vpack.c.b16 %v1422, %v1421
      %vm1431 = vsmask.f32 256
      %v1433 = vshrl.u32 %v1423, 16
      %v1435 = vrot.slane %v1433, 7
      %v1436 = vshll.u32 %v1423, 16
      %v1438 = vor.u32 %v1435, %v1436
      %v1440 = vshrl.u32 %v1424, 16
      %v1442 = vrot.slane %v1440, 7
      %v1443 = vshll.u32 %v1424, 16
      %v1445 = vor.u32 %v1442, %v1443
      %v1446 = vsel %vm1431, %v1435, %v1445
      %v1448 = vshrl.u32 %v1425, 16
      %v1450 = vrot.slane %v1448, 7
      %v1451 = vshll.u32 %v1425, 16
      %v1453 = vor.u32 %v1450, %v1451
      %v1454 = vsel %vm1431, %v1442, %v1453
      %v1456 = vshrl.u32 %v1426, 16
      %v1458 = vrot.slane %v1456, 7
      %v1459 = vshll.u32 %v1426, 16
      %v1461 = vor.u32 %v1458, %v1459
      %v1462 = vsel %vm1431, %v1450, %v1461
      %v1464 = vshrl.u32 %v1427, 16
      %v1466 = vrot.slane %v1464, 7
      %v1467 = vshll.u32 %v1427, 16
      %v1469 = vor.u32 %v1466, %v1467
      %v1470 = vsel %vm1431, %v1458, %v1469
      %v1472 = vshrl.u32 %v1428, 16
      %v1474 = vrot.slane %v1472, 7
      %v1475 = vshll.u32 %v1428, 16
      %v1477 = vor.u32 %v1474, %v1475
      %v1478 = vsel %vm1431, %v1466, %v1477
      %v1480 = vshrl.u32 %v1429, 16
      %v1482 = vrot.slane %v1480, 7
      %v1483 = vshll.u32 %v1429, 16
      %v1485 = vor.u32 %v1482, %v1483
      %v1486 = vsel %vm1431, %v1474, %v1485
      %v1488 = vshrl.u32 %v1430, 16
      %v1490 = vrot.slane %v1488, 7
      %v1491 = vshll.u32 %v1430, 16
      %v1493 = vor.u32 %v1490, %v1491
      %v1494 = vsel %vm1431, %v1482, %v1493
      %vm1496 = vcmask 1040384
      %vm1497 = vmand %vm1496, %vm1431
      %v1498 = vsel %vm1497, 0, %v1438
      %v1499 = vld [vmem:[%s5] sm:$0xf]
      %v1501 = vsel %vm1265, %v1498, 0
      %v1504 = vsel %vm1265, %v1446, 0
      %v1507 = vsel %vm1265, %v1454, 0
      %v1510 = vsel %vm1265, %v1462, 0
      %v1513 = vsel %vm1265, %v1470, 0
      %v1516 = vsel %vm1265, %v1478, 0
      %v1519 = vsel %vm1265, %v1486, 0
      %v1522 = vsel %vm1265, %v1494, 0
      %v1525 = vsel %vm1290, %v1499, 0
      %1527 = vmatprep.subr.bf16.mxu0 0
      %1528 = vmatpush1.bf16.msra.mxu0 0
      %1529 = vmatprep.subr.bf16.mxu0 0
      %1530 = vmatpush1.bf16.msra.mxu0 0
      %1531 = vmatprep.subr.bf16.mxu0 0
      %1532 = vmatpush1.bf16.msra.mxu0 0
      %1533 = vmatprep.subr.bf16.mxu0 0
      %1534 = vmatpush1.bf16.msra.mxu0 0
      %1535 = vmatprep.subr.bf16.mxu0 0
      %1536 = vmatpush1.bf16.msra.mxu0 0
      %1537 = vmatprep.subr.bf16.mxu0 0
      %1538 = vmatpush1.bf16.msra.mxu0 0
      %1539 = vmatprep.subr.bf16.mxu0 0
      %1540 = vmatpush1.bf16.msra.mxu0 0
      %1541 = vmatprep.subr.bf16.mxu0 0
      %1542 = vmatpush1.bf16.msra.mxu0 %v1525
      %1543 = vmatprep.subr.bf16.mxu0 0
      %1544 = vmatpush2.bf16.msra.mxu0 0
      %1545 = vmatprep.subr.bf16.mxu0 0
      %1546 = vmatpush2.bf16.msra.mxu0 0
      %1547 = vmatprep.subr.bf16.mxu0 0
      %1548 = vmatpush2.bf16.msra.mxu0 0
      %1549 = vmatprep.subr.bf16.mxu0 0
      %1550 = vmatpush2.bf16.msra.mxu0 0
      %1551 = vmatprep.subr.bf16.mxu0 0
      %1552 = vmatpush2.bf16.msra.mxu0 0
      %1553 = vmatprep.subr.bf16.mxu0 0
      %1554 = vmatpush2.bf16.msra.mxu0 0
      %1555 = vmatprep.subr.bf16.mxu0 0
      %1556 = vmatpush2.bf16.msra.mxu0 0
      %1557 = vmatprep.subr.bf16.mxu0 0
      %1558 = vmatpush2.bf16.msra.mxu0 0
      %1559 = vmatprep.mubr.bf16.mxu0 0
      %1560 = vmatmul.mubr.bf16.gmra.mxu0 %v1501
      %v1561 = vpop.f32.mrf.mxu0
      %v1562 = vadd.f32 0.0, %v1561
      %v1563 = vpop.f32.mrf.mxu0
      %v1564 = vpop.f32.mrf.mxu0
      %v1565 = vadd.f32 0.0, %v1564
      %v1566 = vpop.f32.mrf.mxu0
      %1567 = vmatprep.mubr.bf16.mxu0 0
      %1568 = vmatmul.mubr.bf16.gmra.mxu0 %v1504
      %v1569 = vpop.f32.mrf.mxu0
      %v1570 = vadd.f32 0.0, %v1569
      %v1571 = vpop.f32.mrf.mxu0
      %v1572 = vpop.f32.mrf.mxu0
      %v1573 = vadd.f32 0.0, %v1572
      %v1574 = vpop.f32.mrf.mxu0
      %1575 = vmatprep.mubr.bf16.mxu0 0
      %1576 = vmatmul.mubr.bf16.gmra.mxu0 %v1507
      %v1577 = vpop.f32.mrf.mxu0
      %v1578 = vadd.f32 0.0, %v1577
      %v1579 = vpop.f32.mrf.mxu0
      %v1580 = vpop.f32.mrf.mxu0
      %v1581 = vadd.f32 0.0, %v1580
      %v1582 = vpop.f32.mrf.mxu0
      %1583 = vmatprep.mubr.bf16.mxu0 0
      %1584 = vmatmul.mubr.bf16.gmra.mxu0 %v1510
      %v1585 = vpop.f32.mrf.mxu0
      %v1586 = vadd.f32 0.0, %v1585
      %v1587 = vpop.f32.mrf.mxu0
      %v1588 = vpop.f32.mrf.mxu0
      %v1589 = vadd.f32 0.0, %v1588
      %v1590 = vpop.f32.mrf.mxu0
      %1591 = vmatprep.mubr.bf16.mxu0 0
      %1592 = vmatmul.mubr.bf16.gmra.mxu0 %v1513
      %v1593 = vpop.f32.mrf.mxu0
      %v1594 = vadd.f32 0.0, %v1593
      %v1595 = vpop.f32.mrf.mxu0
      %v1596 = vpop.f32.mrf.mxu0
      %v1597 = vadd.f32 0.0, %v1596
      %v1598 = vpop.f32.mrf.mxu0
      %1599 = vmatprep.mubr.bf16.mxu0 0
      %1600 = vmatmul.mubr.bf16.gmra.mxu0 %v1516
      %v1601 = vpop.f32.mrf.mxu0
      %v1602 = vadd.f32 0.0, %v1601
      %v1603 = vpop.f32.mrf.mxu0
      %v1604 = vpop.f32.mrf.mxu0
      %v1605 = vadd.f32 0.0, %v1604
      %v1606 = vpop.f32.mrf.mxu0
      %1607 = vmatprep.mubr.bf16.mxu0 0
      %1608 = vmatmul.mubr.bf16.gmra.mxu0 %v1519
      %v1609 = vpop.f32.mrf.mxu0
      %v1610 = vadd.f32 0.0, %v1609
      %v1611 = vpop.f32.mrf.mxu0
      %v1612 = vpop.f32.mrf.mxu0
      %v1613 = vadd.f32 0.0, %v1612
      %v1614 = vpop.f32.mrf.mxu0
      %1615 = vmatprep.mubr.bf16.mxu0 0
      %1616 = vmatmul.mubr.bf16.gmra.mxu0 %v1522
      %v1617 = vpop.f32.mrf.mxu0
      %v1618 = vadd.f32 0.0, %v1617
      %v1619 = vpop.f32.mrf.mxu0
      %v1620 = vpop.f32.mrf.mxu0
      %v1621 = vadd.f32 0.0, %v1620
      %v1622 = vpop.f32.mrf.mxu0
      %1623 = vdwg.mxu0
      %v1624 = vadd.f32 %v1329, %v1562
      %v1625 = vadd.f32 %v1332, %v1565
      %v1626 = vadd.f32 %v1337, %v1570
      %v1627 = vadd.f32 %v1340, %v1573
      %v1628 = vadd.f32 %v1345, %v1578
      %v1629 = vadd.f32 %v1348, %v1581
      %v1630 = vadd.f32 %v1353, %v1586
      %v1631 = vadd.f32 %v1356, %v1589
      %v1632 = vadd.f32 %v1361, %v1594
      %v1633 = vadd.f32 %v1364, %v1597
      %v1634 = vadd.f32 %v1369, %v1602
      %v1635 = vadd.f32 %v1372, %v1605
      %v1636 = vadd.f32 %v1377, %v1610
      %v1637 = vadd.f32 %v1380, %v1613
      %v1638 = vadd.f32 %v1385, %v1618
      %v1639 = vadd.f32 %v1388, %v1621
      %s1640 = scalar_lea.vmem %s5, 4
      %v1641 = vld [vmem:[%s1640] sm:$0xf]
      %v1644 = vunpack.c.l.b16 %v816
      %v1645 = vunpack.c.l.b16 %v817
      %v1646 = vpack.c.b16 %v1645, %v1644
      %v1648 = vsel %vm1265, %v1646, 0
      %v1651 = vsel %vm1290, %v1641, 0
      %1653 = vmatprep.subr.bf16.mxu0 0
      %1654 = vmatpush1.bf16.msra.mxu0 0
      %1655 = vmatprep.subr.bf16.mxu0 0
      %1656 = vmatpush1.bf16.msra.mxu0 0
      %1657 = vmatprep.subr.bf16.mxu0 0
      %1658 = vmatpush1.bf16.msra.mxu0 0
      %1659 = vmatprep.subr.bf16.mxu0 0
      %1660 = vmatpush1.bf16.msra.mxu0 0
      %1661 = vmatprep.subr.bf16.mxu0 0
      %1662 = vmatpush1.bf16.msra.mxu0 0
      %1663 = vmatprep.subr.bf16.mxu0 0
      %1664 = vmatpush1.bf16.msra.mxu0 0
      %1665 = vmatprep.subr.bf16.mxu0 0
      %1666 = vmatpush1.bf16.msra.mxu0 0
      %1667 = vmatprep.subr.bf16.mxu0 0
      %1668 = vmatpush1.bf16.msra.mxu0 %v1651
      %1669 = vmatprep.subr.bf16.mxu0 0
      %1670 = vmatpush2.bf16.msra.mxu0 0
      %1671 = vmatprep.subr.bf16.mxu0 0
      %1672 = vmatpush2.bf16.msra.mxu0 0
      %1673 = vmatprep.subr.bf16.mxu0 0
      %1674 = vmatpush2.bf16.msra.mxu0 0
      %1675 = vmatprep.subr.bf16.mxu0 0
      %1676 = vmatpush2.bf16.msra.mxu0 0
      %1677 = vmatprep.subr.bf16.mxu0 0
      %1678 = vmatpush2.bf16.msra.mxu0 0
      %1679 = vmatprep.subr.bf16.mxu0 0
      %1680 = vmatpush2.bf16.msra.mxu0 0
      %1681 = vmatprep.subr.bf16.mxu0 0
      %1682 = vmatpush2.bf16.msra.mxu0 0
      %1683 = vmatprep.subr.bf16.mxu0 0
      %1684 = vmatpush2.bf16.msra.mxu0 0
      %1685 = vmatprep.mubr.bf16.mxu0 0
      %1686 = vmatmul.mubr.bf16.gmra.mxu0 %v1648
      %v1687 = vpop.f32.mrf.mxu0
      %v1688 = vadd.f32 0.0, %v1687
      %v1689 = vpop.f32.mrf.mxu0
      %v1690 = vpop.f32.mrf.mxu0
      %v1691 = vadd.f32 0.0, %v1690
      %v1692 = vpop.f32.mrf.mxu0
      %1693 = vmatprep.mubr.bf16.mxu0 0
      %1694 = vmatmul.mubr.bf16.gmra.mxu0 %v1267
      %v1695 = vpop.f32.mrf.mxu0
      %v1696 = vadd.f32 0.0, %v1695
      %v1697 = vpop.f32.mrf.mxu0
      %v1698 = vpop.f32.mrf.mxu0
      %v1699 = vadd.f32 0.0, %v1698
      %v1700 = vpop.f32.mrf.mxu0
      %1701 = vmatprep.mubr.bf16.mxu0 0
      %1702 = vmatmul.mubr.bf16.gmra.mxu0 %v1270
      %v1703 = vpop.f32.mrf.mxu0
      %v1704 = vadd.f32 0.0, %v1703
      %v1705 = vpop.f32.mrf.mxu0
      %v1706 = vpop.f32.mrf.mxu0
      %v1707 = vadd.f32 0.0, %v1706
      %v1708 = vpop.f32.mrf.mxu0
      %1709 = vmatprep.mubr.bf16.mxu0 0
      %1710 = vmatmul.mubr.bf16.gmra.mxu0 %v1273
      %v1711 = vpop.f32.mrf.mxu0
      %v1712 = vadd.f32 0.0, %v1711
      %v1713 = vpop.f32.mrf.mxu0
      %v1714 = vpop.f32.mrf.mxu0
      %v1715 = vadd.f32 0.0, %v1714
      %v1716 = vpop.f32.mrf.mxu0
      %1717 = vmatprep.mubr.bf16.mxu0 0
      %1718 = vmatmul.mubr.bf16.gmra.mxu0 %v1276
      %v1719 = vpop.f32.mrf.mxu0
      %v1720 = vadd.f32 0.0, %v1719
      %v1721 = vpop.f32.mrf.mxu0
      %v1722 = vpop.f32.mrf.mxu0
      %v1723 = vadd.f32 0.0, %v1722
      %v1724 = vpop.f32.mrf.mxu0
      %1725 = vmatprep.mubr.bf16.mxu0 0
      %1726 = vmatmul.mubr.bf16.gmra.mxu0 %v1279
      %v1727 = vpop.f32.mrf.mxu0
      %v1728 = vadd.f32 0.0, %v1727
      %v1729 = vpop.f32.mrf.mxu0
      %v1730 = vpop.f32.mrf.mxu0
      %v1731 = vadd.f32 0.0, %v1730
      %v1732 = vpop.f32.mrf.mxu0
      %1733 = vmatprep.mubr.bf16.mxu0 0
      %1734 = vmatmul.mubr.bf16.gmra.mxu0 %v1282
      %v1735 = vpop.f32.mrf.mxu0
      %v1736 = vadd.f32 0.0, %v1735
      %v1737 = vpop.f32.mrf.mxu0
      %v1738 = vpop.f32.mrf.mxu0
      %v1739 = vadd.f32 0.0, %v1738
      %v1740 = vpop.f32.mrf.mxu0
      %1741 = vmatprep.mubr.bf16.mxu0 0
      %1742 = vmatmul.mubr.bf16.gmra.mxu0 %v1285
      %v1743 = vpop.f32.mrf.mxu0
      %v1744 = vadd.f32 0.0, %v1743
      %v1745 = vpop.f32.mrf.mxu0
      %v1746 = vpop.f32.mrf.mxu0
      %v1747 = vadd.f32 0.0, %v1746
      %v1748 = vpop.f32.mrf.mxu0
      %1749 = vdwg.mxu0
      %v1750 = vadd.f32 %v1624, %v1688
      %v1751 = vadd.f32 %v1625, %v1691
      %v1752 = vadd.f32 %v1626, %v1696
      %v1753 = vadd.f32 %v1627, %v1699
      %v1754 = vadd.f32 %v1628, %v1704
      %v1755 = vadd.f32 %v1629, %v1707
      %v1756 = vadd.f32 %v1630, %v1712
      %v1757 = vadd.f32 %v1631, %v1715
      %v1758 = vadd.f32 %v1632, %v1720
      %v1759 = vadd.f32 %v1633, %v1723
      %v1760 = vadd.f32 %v1634, %v1728
      %v1761 = vadd.f32 %v1635, %v1731
      %v1762 = vadd.f32 %v1636, %v1736
      %v1763 = vadd.f32 %v1637, %v1739
      %v1764 = vadd.f32 %v1638, %v1744
      %v1765 = vadd.f32 %v1639, %v1747
      %v1782 = vunpack.c.l.b16 %v1137
      %v1783 = vunpack.c.l.b16 %v1138
      %v1784 = vunpack.c.l.b16 %v1139
      %v1785 = vunpack.c.l.b16 %v1140
      %v1786 = vunpack.c.l.b16 %v1141
      %v1787 = vunpack.c.l.b16 %v1142
      %v1788 = vunpack.c.l.b16 %v1143
      %v1789 = vunpack.c.l.b16 %v1144
      %v1790 = vunpack.c.l.b16 %v1145
      %v1791 = vunpack.c.l.b16 %v1146
      %v1792 = vunpack.c.l.b16 %v1147
      %v1793 = vunpack.c.l.b16 %v1148
      %v1794 = vunpack.c.l.b16 %v1149
      %v1795 = vunpack.c.l.b16 %v1150
      %v1796 = vunpack.c.l.b16 %v1151
      %v1797 = vunpack.c.l.b16 %v1152
      %v1798 = vpack.c.b16 %v1783, %v1782
      %v1799 = vpack.c.b16 %v1785, %v1784
      %v1800 = vpack.c.b16 %v1787, %v1786
      %v1801 = vpack.c.b16 %v1789, %v1788
      %v1802 = vpack.c.b16 %v1791, %v1790
      %v1803 = vpack.c.b16 %v1793, %v1792
      %v1804 = vpack.c.b16 %v1795, %v1794
      %v1805 = vpack.c.b16 %v1797, %v1796
      %vm1806 = vsmask.f32 7424
      %v1808 = vshrl.u32 %v1798, 16
      %v1810 = vshll.u32 %v1798, 16
      %v1812 = vrot.slane %v1810, 1
      %v1813 = vor.u32 %v1808, %v1812
      %v1815 = vshll.u32 %v1799, 16
      %v1817 = vrot.slane %v1815, 1
      %v1818 = vsel %vm1806, %v1813, %v1817
      %v1819 = vshrl.u32 %v1799, 16
      %v1821 = vor.u32 %v1819, %v1817
      %v1823 = vshll.u32 %v1800, 16
      %v1825 = vrot.slane %v1823, 1
      %v1826 = vsel %vm1806, %v1821, %v1825
      %v1827 = vshrl.u32 %v1800, 16
      %v1829 = vor.u32 %v1827, %v1825
      %v1831 = vshll.u32 %v1801, 16
      %v1833 = vrot.slane %v1831, 1
      %v1834 = vsel %vm1806, %v1829, %v1833
      %v1835 = vshrl.u32 %v1801, 16
      %v1837 = vor.u32 %v1835, %v1833
      %v1839 = vshll.u32 %v1802, 16
      %v1841 = vrot.slane %v1839, 1
      %v1842 = vsel %vm1806, %v1837, %v1841
      %v1843 = vshrl.u32 %v1802, 16
      %v1845 = vor.u32 %v1843, %v1841
      %v1847 = vshll.u32 %v1803, 16
      %v1849 = vrot.slane %v1847, 1
      %v1850 = vsel %vm1806, %v1845, %v1849
      %v1851 = vshrl.u32 %v1803, 16
      %v1853 = vor.u32 %v1851, %v1849
      %v1855 = vshll.u32 %v1804, 16
      %v1857 = vrot.slane %v1855, 1
      %v1858 = vsel %vm1806, %v1853, %v1857
      %v1859 = vshrl.u32 %v1804, 16
      %v1861 = vor.u32 %v1859, %v1857
      %v1863 = vshll.u32 %v1805, 16
      %v1865 = vrot.slane %v1863, 1
      %v1866 = vsel %vm1806, %v1861, %v1865
      %v1867 = vshrl.u32 %v1805, 16
      %v1869 = vor.u32 %v1867, %v1865
      %vm1871 = vcmask 1047552
      %vm1872 = vmand %vm1871, %vm1806
      %v1873 = vsel %vm1872, %v1869, 0
      %s1874 = scalar_lea.vmem %s5, 8
      %v1875 = vld [vmem:[%s1874] sm:$0xf]
      %v1877 = vsel %vm1265, %v1818, 0
      %v1880 = vsel %vm1265, %v1826, 0
      %v1883 = vsel %vm1265, %v1834, 0
      %v1886 = vsel %vm1265, %v1842, 0
      %v1889 = vsel %vm1265, %v1850, 0
      %v1892 = vsel %vm1265, %v1858, 0
      %v1895 = vsel %vm1265, %v1866, 0
      %v1898 = vsel %vm1265, %v1873, 0
      %v1901 = vsel %vm1290, %v1875, 0
      %1903 = vmatprep.subr.bf16.mxu0 0
      %1904 = vmatpush1.bf16.msra.mxu0 0
      %1905 = vmatprep.subr.bf16.mxu0 0
      %1906 = vmatpush1.bf16.msra.mxu0 0
      %1907 = vmatprep.subr.bf16.mxu0 0
      %1908 = vmatpush1.bf16.msra.mxu0 0
      %1909 = vmatprep.subr.bf16.mxu0 0
      %1910 = vmatpush1.bf16.msra.mxu0 0
      %1911 = vmatprep.subr.bf16.mxu0 0
      %1912 = vmatpush1.bf16.msra.mxu0 0
      %1913 = vmatprep.subr.bf16.mxu0 0
      %1914 = vmatpush1.bf16.msra.mxu0 0
      %1915 = vmatprep.subr.bf16.mxu0 0
      %1916 = vmatpush1.bf16.msra.mxu0 0
      %1917 = vmatprep.subr.bf16.mxu0 0
      %1918 = vmatpush1.bf16.msra.mxu0 %v1901
      %1919 = vmatprep.subr.bf16.mxu0 0
      %1920 = vmatpush2.bf16.msra.mxu0 0
      %1921 = vmatprep.subr.bf16.mxu0 0
      %1922 = vmatpush2.bf16.msra.mxu0 0
      %1923 = vmatprep.subr.bf16.mxu0 0
      %1924 = vmatpush2.bf16.msra.mxu0 0
      %1925 = vmatprep.subr.bf16.mxu0 0
      %1926 = vmatpush2.bf16.msra.mxu0 0
      %1927 = vmatprep.subr.bf16.mxu0 0
      %1928 = vmatpush2.bf16.msra.mxu0 0
      %1929 = vmatprep.subr.bf16.mxu0 0
      %1930 = vmatpush2.bf16.msra.mxu0 0
      %1931 = vmatprep.subr.bf16.mxu0 0
      %1932 = vmatpush2.bf16.msra.mxu0 0
      %1933 = vmatprep.subr.bf16.mxu0 0
      %1934 = vmatpush2.bf16.msra.mxu0 0
      %1935 = vmatprep.mubr.bf16.mxu0 0
      %1936 = vmatmul.mubr.bf16.gmra.mxu0 %v1877
      %v1937 = vpop.f32.mrf.mxu0
      %v1938 = vadd.f32 0.0, %v1937
      %v1939 = vpop.f32.mrf.mxu0
      %v1940 = vpop.f32.mrf.mxu0
      %v1941 = vadd.f32 0.0, %v1940
      %v1942 = vpop.f32.mrf.mxu0
      %1943 = vmatprep.mubr.bf16.mxu0 0
      %1944 = vmatmul.mubr.bf16.gmra.mxu0 %v1880
      %v1945 = vpop.f32.mrf.mxu0
      %v1946 = vadd.f32 0.0, %v1945
      %v1947 = vpop.f32.mrf.mxu0
      %v1948 = vpop.f32.mrf.mxu0
      %v1949 = vadd.f32 0.0, %v1948
      %v1950 = vpop.f32.mrf.mxu0
      %1951 = vmatprep.mubr.bf16.mxu0 0
      %1952 = vmatmul.mubr.bf16.gmra.mxu0 %v1883
      %v1953 = vpop.f32.mrf.mxu0
      %v1954 = vadd.f32 0.0, %v1953
      %v1955 = vpop.f32.mrf.mxu0
      %v1956 = vpop.f32.mrf.mxu0
      %v1957 = vadd.f32 0.0, %v1956
      %v1958 = vpop.f32.mrf.mxu0
      %1959 = vmatprep.mubr.bf16.mxu0 0
      %1960 = vmatmul.mubr.bf16.gmra.mxu0 %v1886
      %v1961 = vpop.f32.mrf.mxu0
      %v1962 = vadd.f32 0.0, %v1961
      %v1963 = vpop.f32.mrf.mxu0
      %v1964 = vpop.f32.mrf.mxu0
      %v1965 = vadd.f32 0.0, %v1964
      %v1966 = vpop.f32.mrf.mxu0
      %1967 = vmatprep.mubr.bf16.mxu0 0
      %1968 = vmatmul.mubr.bf16.gmra.mxu0 %v1889
      %v1969 = vpop.f32.mrf.mxu0
      %v1970 = vadd.f32 0.0, %v1969
      %v1971 = vpop.f32.mrf.mxu0
      %v1972 = vpop.f32.mrf.mxu0
      %v1973 = vadd.f32 0.0, %v1972
      %v1974 = vpop.f32.mrf.mxu0
      %1975 = vmatprep.mubr.bf16.mxu0 0
      %1976 = vmatmul.mubr.bf16.gmra.mxu0 %v1892
      %v1977 = vpop.f32.mrf.mxu0
      %v1978 = vadd.f32 0.0, %v1977
      %v1979 = vpop.f32.mrf.mxu0
      %v1980 = vpop.f32.mrf.mxu0
      %v1981 = vadd.f32 0.0, %v1980
      %v1982 = vpop.f32.mrf.mxu0
      %1983 = vmatprep.mubr.bf16.mxu0 0
      %1984 = vmatmul.mubr.bf16.gmra.mxu0 %v1895
      %v1985 = vpop.f32.mrf.mxu0
      %v1986 = vadd.f32 0.0, %v1985
      %v1987 = vpop.f32.mrf.mxu0
      %v1988 = vpop.f32.mrf.mxu0
      %v1989 = vadd.f32 0.0, %v1988
      %v1990 = vpop.f32.mrf.mxu0
      %1991 = vmatprep.mubr.bf16.mxu0 0
      %1992 = vmatmul.mubr.bf16.gmra.mxu0 %v1898
      %v1993 = vpop.f32.mrf.mxu0
      %v1994 = vadd.f32 0.0, %v1993
      %v1995 = vpop.f32.mrf.mxu0
      %v1996 = vpop.f32.mrf.mxu0
      %v1997 = vadd.f32 0.0, %v1996
      %v1998 = vpop.f32.mrf.mxu0
      %1999 = vdwg.mxu0
      %v2000 = vadd.f32 %v1750, %v1938
      %v2001 = vadd.f32 %v1751, %v1941
      %v2002 = vadd.f32 %v1752, %v1946
      %v2003 = vadd.f32 %v1753, %v1949
      %v2004 = vadd.f32 %v1754, %v1954
      %v2005 = vadd.f32 %v1755, %v1957
      %v2006 = vadd.f32 %v1756, %v1962
      %v2007 = vadd.f32 %v1757, %v1965
      %v2008 = vadd.f32 %v1758, %v1970
      %v2009 = vadd.f32 %v1759, %v1973
      %v2010 = vadd.f32 %v1760, %v1978
      %v2011 = vadd.f32 %v1761, %v1981
      %v2012 = vadd.f32 %v1762, %v1986
      %v2013 = vadd.f32 %v1763, %v1989
      %v2014 = vadd.f32 %v1764, %v1994
      %v2015 = vadd.f32 %v1765, %v1997
      %v2018 = vunpack.c.l.b16 %v1213
      %v2019 = vunpack.c.l.b16 %v1214
      %v2020 = vpack.c.b16 %v2019, %v2018
      %v2022 = vshrl.u32 %v2020, 16
      %v2024 = vrot.slane %v2022, 7
      %v2025 = vshll.u32 %v2020, 16
      %v2027 = vor.u32 %v2024, %v2025
      %v2028 = vsel %vm1431, %v1490, %v2027
      %v2030 = vsel %vm1497, 0, %v1445
      %s2031 = scalar_lea.vmem %s5, 12
      %v2032 = vld [vmem:[%s2031] sm:$0xf]
      %v2034 = vsel %vm1265, %v2030, 0
      %v2037 = vsel %vm1265, %v2028, 0
      %v2040 = vsel %vm1290, %v2032, 0
      %2042 = vmatprep.subr.bf16.mxu0 0
      %2043 = vmatpush1.bf16.msra.mxu0 0
      %2044 = vmatprep.subr.bf16.mxu0 0
      %2045 = vmatpush1.bf16.msra.mxu0 0
      %2046 = vmatprep.subr.bf16.mxu0 0
      %2047 = vmatpush1.bf16.msra.mxu0 0
      %2048 = vmatprep.subr.bf16.mxu0 0
      %2049 = vmatpush1.bf16.msra.mxu0 0
      %2050 = vmatprep.subr.bf16.mxu0 0
      %2051 = vmatpush1.bf16.msra.mxu0 0
      %2052 = vmatprep.subr.bf16.mxu0 0
      %2053 = vmatpush1.bf16.msra.mxu0 0
      %2054 = vmatprep.subr.bf16.mxu0 0
      %2055 = vmatpush1.bf16.msra.mxu0 0
      %2056 = vmatprep.subr.bf16.mxu0 0
      %2057 = vmatpush1.bf16.msra.mxu0 %v2040
      %2058 = vmatprep.subr.bf16.mxu0 0
      %2059 = vmatpush2.bf16.msra.mxu0 0
      %2060 = vmatprep.subr.bf16.mxu0 0
      %2061 = vmatpush2.bf16.msra.mxu0 0
      %2062 = vmatprep.subr.bf16.mxu0 0
      %2063 = vmatpush2.bf16.msra.mxu0 0
      %2064 = vmatprep.subr.bf16.mxu0 0
      %2065 = vmatpush2.bf16.msra.mxu0 0
      %2066 = vmatprep.subr.bf16.mxu0 0
      %2067 = vmatpush2.bf16.msra.mxu0 0
      %2068 = vmatprep.subr.bf16.mxu0 0
      %2069 = vmatpush2.bf16.msra.mxu0 0
      %2070 = vmatprep.subr.bf16.mxu0 0
      %2071 = vmatpush2.bf16.msra.mxu0 0
      %2072 = vmatprep.subr.bf16.mxu0 0
      %2073 = vmatpush2.bf16.msra.mxu0 0
      %2074 = vmatprep.mubr.bf16.mxu0 0
      %2075 = vmatmul.mubr.bf16.gmra.mxu0 %v2034
      %v2076 = vpop.f32.mrf.mxu0
      %v2077 = vadd.f32 0.0, %v2076
      %v2078 = vpop.f32.mrf.mxu0
      %v2079 = vpop.f32.mrf.mxu0
      %v2080 = vadd.f32 0.0, %v2079
      %v2081 = vpop.f32.mrf.mxu0
      %2082 = vmatprep.mubr.bf16.mxu0 0
      %2083 = vmatmul.mubr.bf16.gmra.mxu0 %v1507
      %v2084 = vpop.f32.mrf.mxu0
      %v2085 = vadd.f32 0.0, %v2084
      %v2086 = vpop.f32.mrf.mxu0
      %v2087 = vpop.f32.mrf.mxu0
      %v2088 = vadd.f32 0.0, %v2087
      %v2089 = vpop.f32.mrf.mxu0
      %2090 = vmatprep.mubr.bf16.mxu0 0
      %2091 = vmatmul.mubr.bf16.gmra.mxu0 %v1510
      %v2092 = vpop.f32.mrf.mxu0
      %v2093 = vadd.f32 0.0, %v2092
      %v2094 = vpop.f32.mrf.mxu0
      %v2095 = vpop.f32.mrf.mxu0
      %v2096 = vadd.f32 0.0, %v2095
      %v2097 = vpop.f32.mrf.mxu0
      %2098 = vmatprep.mubr.bf16.mxu0 0
      %2099 = vmatmul.mubr.bf16.gmra.mxu0 %v1513
      %v2100 = vpop.f32.mrf.mxu0
      %v2101 = vadd.f32 0.0, %v2100
      %v2102 = vpop.f32.mrf.mxu0
      %v2103 = vpop.f32.mrf.mxu0
      %v2104 = vadd.f32 0.0, %v2103
      %v2105 = vpop.f32.mrf.mxu0
      %2106 = vmatprep.mubr.bf16.mxu0 0
      %2107 = vmatmul.mubr.bf16.gmra.mxu0 %v1516
      %v2108 = vpop.f32.mrf.mxu0
      %v2109 = vadd.f32 0.0, %v2108
      %v2110 = vpop.f32.mrf.mxu0
      %v2111 = vpop.f32.mrf.mxu0
      %v2112 = vadd.f32 0.0, %v2111
      %v2113 = vpop.f32.mrf.mxu0
      %2114 = vmatprep.mubr.bf16.mxu0 0
      %2115 = vmatmul.mubr.bf16.gmra.mxu0 %v1519
      %v2116 = vpop.f32.mrf.mxu0
      %v2117 = vadd.f32 0.0, %v2116
      %v2118 = vpop.f32.mrf.mxu0
      %v2119 = vpop.f32.mrf.mxu0
      %v2120 = vadd.f32 0.0, %v2119
      %v2121 = vpop.f32.mrf.mxu0
      %2122 = vmatprep.mubr.bf16.mxu0 0
      %2123 = vmatmul.mubr.bf16.gmra.mxu0 %v1522
      %v2124 = vpop.f32.mrf.mxu0
      %v2125 = vadd.f32 0.0, %v2124
      %v2126 = vpop.f32.mrf.mxu0
      %v2127 = vpop.f32.mrf.mxu0
      %v2128 = vadd.f32 0.0, %v2127
      %v2129 = vpop.f32.mrf.mxu0
      %2130 = vmatprep.mubr.bf16.mxu0 0
      %2131 = vmatmul.mubr.bf16.gmra.mxu0 %v2037
      %v2132 = vpop.f32.mrf.mxu0
      %v2133 = vadd.f32 0.0, %v2132
      %v2134 = vpop.f32.mrf.mxu0
      %v2135 = vpop.f32.mrf.mxu0
      %v2136 = vadd.f32 0.0, %v2135
      %v2137 = vpop.f32.mrf.mxu0
      %2138 = vdwg.mxu0
      %v2139 = vadd.f32 %v2000, %v2077
      %v2140 = vadd.f32 %v2001, %v2080
      %v2141 = vadd.f32 %v2002, %v2085
      %v2142 = vadd.f32 %v2003, %v2088
      %v2143 = vadd.f32 %v2004, %v2093
      %v2144 = vadd.f32 %v2005, %v2096
      %v2145 = vadd.f32 %v2006, %v2101
      %v2146 = vadd.f32 %v2007, %v2104
      %v2147 = vadd.f32 %v2008, %v2109
      %v2148 = vadd.f32 %v2009, %v2112
      %v2149 = vadd.f32 %v2010, %v2117
      %v2150 = vadd.f32 %v2011, %v2120
      %v2151 = vadd.f32 %v2012, %v2125
      %v2152 = vadd.f32 %v2013, %v2128
      %v2153 = vadd.f32 %v2014, %v2133
      %v2154 = vadd.f32 %v2015, %v2136
      %v2157 = vunpack.c.l.b16 %v1153
      %v2158 = vunpack.c.l.b16 %v1154
      %v2159 = vpack.c.b16 %v2158, %v2157
      %v2161 = vshll.u32 %v2159, 16
      %v2163 = vrot.slane %v2161, 1
      %v2164 = vsel %vm1806, %v1869, %v2163
      %v2165 = vshrl.u32 %v2159, 16
      %v2167 = vor.u32 %v2165, %v2163
      %v2169 = vsel %vm1872, %v2167, 0
      %s2170 = scalar_lea.vmem %s5, 16
      %v2171 = vld [vmem:[%s2170] sm:$0xf]
      %v2173 = vsel %vm1265, %v2164, 0
      %v2176 = vsel %vm1265, %v2169, 0
      %v2179 = vsel %vm1290, %v2171, 0
      %2181 = vmatprep.subr.bf16.mxu0 0
      %2182 = vmatpush1.bf16.msra.mxu0 0
      %2183 = vmatprep.subr.bf16.mxu0 0
      %2184 = vmatpush1.bf16.msra.mxu0 0
      %2185 = vmatprep.subr.bf16.mxu0 0
      %2186 = vmatpush1.bf16.msra.mxu0 0
      %2187 = vmatprep.subr.bf16.mxu0 0
      %2188 = vmatpush1.bf16.msra.mxu0 0
      %2189 = vmatprep.subr.bf16.mxu0 0
      %2190 = vmatpush1.bf16.msra.mxu0 0
      %2191 = vmatprep.subr.bf16.mxu0 0
      %2192 = vmatpush1.bf16.msra.mxu0 0
      %2193 = vmatprep.subr.bf16.mxu0 0
      %2194 = vmatpush1.bf16.msra.mxu0 0
      %2195 = vmatprep.subr.bf16.mxu0 0
      %2196 = vmatpush1.bf16.msra.mxu0 %v2179
      %2197 = vmatprep.subr.bf16.mxu0 0
      %2198 = vmatpush2.bf16.msra.mxu0 0
      %2199 = vmatprep.subr.bf16.mxu0 0
      %2200 = vmatpush2.bf16.msra.mxu0 0
      %2201 = vmatprep.subr.bf16.mxu0 0
      %2202 = vmatpush2.bf16.msra.mxu0 0
      %2203 = vmatprep.subr.bf16.mxu0 0
      %2204 = vmatpush2.bf16.msra.mxu0 0
      %2205 = vmatprep.subr.bf16.mxu0 0
      %2206 = vmatpush2.bf16.msra.mxu0 0
      %2207 = vmatprep.subr.bf16.mxu0 0
      %2208 = vmatpush2.bf16.msra.mxu0 0
      %2209 = vmatprep.subr.bf16.mxu0 0
      %2210 = vmatpush2.bf16.msra.mxu0 0
      %2211 = vmatprep.subr.bf16.mxu0 0
      %2212 = vmatpush2.bf16.msra.mxu0 0
      %2213 = vmatprep.mubr.bf16.mxu0 0
      %2214 = vmatmul.mubr.bf16.gmra.mxu0 %v1880
      %v2215 = vpop.f32.mrf.mxu0
      %v2216 = vadd.f32 0.0, %v2215
      %v2217 = vpop.f32.mrf.mxu0
      %v2218 = vpop.f32.mrf.mxu0
      %v2219 = vadd.f32 0.0, %v2218
      %v2220 = vpop.f32.mrf.mxu0
      %2221 = vmatprep.mubr.bf16.mxu0 0
      %2222 = vmatmul.mubr.bf16.gmra.mxu0 %v1883
      %v2223 = vpop.f32.mrf.mxu0
      %v2224 = vadd.f32 0.0, %v2223
      %v2225 = vpop.f32.mrf.mxu0
      %v2226 = vpop.f32.mrf.mxu0
      %v2227 = vadd.f32 0.0, %v2226
      %v2228 = vpop.f32.mrf.mxu0
      %2229 = vmatprep.mubr.bf16.mxu0 0
      %2230 = vmatmul.mubr.bf16.gmra.mxu0 %v1886
      %v2231 = vpop.f32.mrf.mxu0
      %v2232 = vadd.f32 0.0, %v2231
      %v2233 = vpop.f32.mrf.mxu0
      %v2234 = vpop.f32.mrf.mxu0
      %v2235 = vadd.f32 0.0, %v2234
      %v2236 = vpop.f32.mrf.mxu0
      %2237 = vmatprep.mubr.bf16.mxu0 0
      %2238 = vmatmul.mubr.bf16.gmra.mxu0 %v1889
      %v2239 = vpop.f32.mrf.mxu0
      %v2240 = vadd.f32 0.0, %v2239
      %v2241 = vpop.f32.mrf.mxu0
      %v2242 = vpop.f32.mrf.mxu0
      %v2243 = vadd.f32 0.0, %v2242
      %v2244 = vpop.f32.mrf.mxu0
      %2245 = vmatprep.mubr.bf16.mxu0 0
      %2246 = vmatmul.mubr.bf16.gmra.mxu0 %v1892
      %v2247 = vpop.f32.mrf.mxu0
      %v2248 = vadd.f32 0.0, %v2247
      %v2249 = vpop.f32.mrf.mxu0
      %v2250 = vpop.f32.mrf.mxu0
      %v2251 = vadd.f32 0.0, %v2250
      %v2252 = vpop.f32.mrf.mxu0
      %2253 = vmatprep.mubr.bf16.mxu0 0
      %2254 = vmatmul.mubr.bf16.gmra.mxu0 %v1895
      %v2255 = vpop.f32.mrf.mxu0
      %v2256 = vadd.f32 0.0, %v2255
      %v2257 = vpop.f32.mrf.mxu0
      %v2258 = vpop.f32.mrf.mxu0
      %v2259 = vadd.f32 0.0, %v2258
      %v2260 = vpop.f32.mrf.mxu0
      %2261 = vmatprep.mubr.bf16.mxu0 0
      %2262 = vmatmul.mubr.bf16.gmra.mxu0 %v2173
      %v2263 = vpop.f32.mrf.mxu0
      %v2264 = vadd.f32 0.0, %v2263
      %v2265 = vpop.f32.mrf.mxu0
      %v2266 = vpop.f32.mrf.mxu0
      %v2267 = vadd.f32 0.0, %v2266
      %v2268 = vpop.f32.mrf.mxu0
      %2269 = vmatprep.mubr.bf16.mxu0 0
      %2270 = vmatmul.mubr.bf16.gmra.mxu0 %v2176
      %v2271 = vpop.f32.mrf.mxu0
      %v2272 = vadd.f32 0.0, %v2271
      %v2273 = vpop.f32.mrf.mxu0
      %v2274 = vpop.f32.mrf.mxu0
      %v2275 = vadd.f32 0.0, %v2274
      %v2276 = vpop.f32.mrf.mxu0
      %2277 = vdwg.mxu0
      %v2278 = vadd.f32 %v2139, %v2216
      %v2279 = vadd.f32 %v2140, %v2219
      %v2280 = vadd.f32 %v2141, %v2224
      %v2281 = vadd.f32 %v2142, %v2227
      %v2282 = vadd.f32 %v2143, %v2232
      %v2283 = vadd.f32 %v2144, %v2235
      %v2284 = vadd.f32 %v2145, %v2240
      %v2285 = vadd.f32 %v2146, %v2243
      %v2286 = vadd.f32 %v2147, %v2248
      %v2287 = vadd.f32 %v2148, %v2251
      %v2288 = vadd.f32 %v2149, %v2256
      %v2289 = vadd.f32 %v2150, %v2259
      %v2290 = vadd.f32 %v2151, %v2264
      %v2291 = vadd.f32 %v2152, %v2267
      %v2292 = vadd.f32 %v2153, %v2272
      %v2293 = vadd.f32 %v2154, %v2275
      %v2296 = vunpack.c.l.b16 %v1215
      %v2297 = vunpack.c.l.b16 %v1216
      %v2298 = vpack.c.b16 %v2297, %v2296
      %v2300 = vshrl.u32 %v2298, 16
      %v2302 = vrot.slane %v2300, 7
      %v2303 = vshll.u32 %v2298, 16
      %v2305 = vor.u32 %v2302, %v2303
      %v2306 = vsel %vm1431, %v2024, %v2305
      %v2308 = vsel %vm1497, 0, %v1453
      %s2309 = scalar_lea.vmem %s5, 20
      %v2310 = vld [vmem:[%s2309] sm:$0xf]
      %v2312 = vsel %vm1265, %v2308, 0
      %v2315 = vsel %vm1265, %v2306, 0
      %v2318 = vsel %vm1290, %v2310, 0
      %2320 = vmatprep.subr.bf16.mxu0 0
      %2321 = vmatpush1.bf16.msra.mxu0 0
      %2322 = vmatprep.subr.bf16.mxu0 0
      %2323 = vmatpush1.bf16.msra.mxu0 0
      %2324 = vmatprep.subr.bf16.mxu0 0
      %2325 = vmatpush1.bf16.msra.mxu0 0
      %2326 = vmatprep.subr.bf16.mxu0 0
      %2327 = vmatpush1.bf16.msra.mxu0 0
      %2328 = vmatprep.subr.bf16.mxu0 0
      %2329 = vmatpush1.bf16.msra.mxu0 0
      %2330 = vmatprep.subr.bf16.mxu0 0
      %2331 = vmatpush1.bf16.msra.mxu0 0
      %2332 = vmatprep.subr.bf16.mxu0 0
      %2333 = vmatpush1.bf16.msra.mxu0 0
      %2334 = vmatprep.subr.bf16.mxu0 0
      %2335 = vmatpush1.bf16.msra.mxu0 %v2318
      %2336 = vmatprep.subr.bf16.mxu0 0
      %2337 = vmatpush2.bf16.msra.mxu0 0
      %2338 = vmatprep.subr.bf16.mxu0 0
      %2339 = vmatpush2.bf16.msra.mxu0 0
      %2340 = vmatprep.subr.bf16.mxu0 0
      %2341 = vmatpush2.bf16.msra.mxu0 0
      %2342 = vmatprep.subr.bf16.mxu0 0
      %2343 = vmatpush2.bf16.msra.mxu0 0
      %2344 = vmatprep.subr.bf16.mxu0 0
      %2345 = vmatpush2.bf16.msra.mxu0 0
      %2346 = vmatprep.subr.bf16.mxu0 0
      %2347 = vmatpush2.bf16.msra.mxu0 0
      %2348 = vmatprep.subr.bf16.mxu0 0
      %2349 = vmatpush2.bf16.msra.mxu0 0
      %2350 = vmatprep.subr.bf16.mxu0 0
      %2351 = vmatpush2.bf16.msra.mxu0 0
      %2352 = vmatprep.mubr.bf16.mxu0 0
      %2353 = vmatmul.mubr.bf16.gmra.mxu0 %v2312
      %v2354 = vpop.f32.mrf.mxu0
      %v2355 = vadd.f32 0.0, %v2354
      %v2356 = vpop.f32.mrf.mxu0
      %v2357 = vpop.f32.mrf.mxu0
      %v2358 = vadd.f32 0.0, %v2357
      %v2359 = vpop.f32.mrf.mxu0
      %2360 = vmatprep.mubr.bf16.mxu0 0
      %2361 = vmatmul.mubr.bf16.gmra.mxu0 %v1510
      %v2362 = vpop.f32.mrf.mxu0
      %v2363 = vadd.f32 0.0, %v2362
      %v2364 = vpop.f32.mrf.mxu0
      %v2365 = vpop.f32.mrf.mxu0
      %v2366 = vadd.f32 0.0, %v2365
      %v2367 = vpop.f32.mrf.mxu0
      %2368 = vmatprep.mubr.bf16.mxu0 0
      %2369 = vmatmul.mubr.bf16.gmra.mxu0 %v1513
      %v2370 = vpop.f32.mrf.mxu0
      %v2371 = vadd.f32 0.0, %v2370
      %v2372 = vpop.f32.mrf.mxu0
      %v2373 = vpop.f32.mrf.mxu0
      %v2374 = vadd.f32 0.0, %v2373
      %v2375 = vpop.f32.mrf.mxu0
      %2376 = vmatprep.mubr.bf16.mxu0 0
      %2377 = vmatmul.mubr.bf16.gmra.mxu0 %v1516
      %v2378 = vpop.f32.mrf.mxu0
      %v2379 = vadd.f32 0.0, %v2378
      %v2380 = vpop.f32.mrf.mxu0
      %v2381 = vpop.f32.mrf.mxu0
      %v2382 = vadd.f32 0.0, %v2381
      %v2383 = vpop.f32.mrf.mxu0
      %2384 = vmatprep.mubr.bf16.mxu0 0
      %2385 = vmatmul.mubr.bf16.gmra.mxu0 %v1519
      %v2386 = vpop.f32.mrf.mxu0
      %v2387 = vadd.f32 0.0, %v2386
      %v2388 = vpop.f32.mrf.mxu0
      %v2389 = vpop.f32.mrf.mxu0
      %v2390 = vadd.f32 0.0, %v2389
      %v2391 = vpop.f32.mrf.mxu0
      %2392 = vmatprep.mubr.bf16.mxu0 0
      %2393 = vmatmul.mubr.bf16.gmra.mxu0 %v1522
      %v2394 = vpop.f32.mrf.mxu0
      %v2395 = vadd.f32 0.0, %v2394
      %v2396 = vpop.f32.mrf.mxu0
      %v2397 = vpop.f32.mrf.mxu0
      %v2398 = vadd.f32 0.0, %v2397
      %v2399 = vpop.f32.mrf.mxu0
      %2400 = vmatprep.mubr.bf16.mxu0 0
      %2401 = vmatmul.mubr.bf16.gmra.mxu0 %v2037
      %v2402 = vpop.f32.mrf.mxu0
      %v2403 = vadd.f32 0.0, %v2402
      %v2404 = vpop.f32.mrf.mxu0
      %v2405 = vpop.f32.mrf.mxu0
      %v2406 = vadd.f32 0.0, %v2405
      %v2407 = vpop.f32.mrf.mxu0
      %2408 = vmatprep.mubr.bf16.mxu0 0
      %2409 = vmatmul.mubr.bf16.gmra.mxu0 %v2315
      %v2410 = vpop.f32.mrf.mxu0
      %v2411 = vadd.f32 0.0, %v2410
      %v2412 = vpop.f32.mrf.mxu0
      %v2413 = vpop.f32.mrf.mxu0
      %v2414 = vadd.f32 0.0, %v2413
      %v2415 = vpop.f32.mrf.mxu0
      %2416 = vdwg.mxu0
      %v2417 = vadd.f32 %v2278, %v2355
      %v2418 = vadd.f32 %v2279, %v2358
      %v2419 = vadd.f32 %v2280, %v2363
      %v2420 = vadd.f32 %v2281, %v2366
      %v2421 = vadd.f32 %v2282, %v2371
      %v2422 = vadd.f32 %v2283, %v2374
      %v2423 = vadd.f32 %v2284, %v2379
      %v2424 = vadd.f32 %v2285, %v2382
      %v2425 = vadd.f32 %v2286, %v2387
      %v2426 = vadd.f32 %v2287, %v2390
      %v2427 = vadd.f32 %v2288, %v2395
      %v2428 = vadd.f32 %v2289, %v2398
      %v2429 = vadd.f32 %v2290, %v2403
      %v2430 = vadd.f32 %v2291, %v2406
      %v2431 = vadd.f32 %v2292, %v2411
      %v2432 = vadd.f32 %v2293, %v2414
      %s2433 = scalar_lea.vmem %s5, 24
      %v2434 = vld [vmem:[%s2433] sm:$0xf]
      %v2437 = vunpack.c.l.b16 %v834
      %v2438 = vunpack.c.l.b16 %v835
      %v2439 = vpack.c.b16 %v2438, %v2437
      %v2441 = vsel %vm1265, %v2439, 0
      %v2444 = vsel %vm1290, %v2434, 0
      %2446 = vmatprep.subr.bf16.mxu0 0
      %2447 = vmatpush1.bf16.msra.mxu0 0
      %2448 = vmatprep.subr.bf16.mxu0 0
      %2449 = vmatpush1.bf16.msra.mxu0 0
      %2450 = vmatprep.subr.bf16.mxu0 0
      %2451 = vmatpush1.bf16.msra.mxu0 0
      %2452 = vmatprep.subr.bf16.mxu0 0
      %2453 = vmatpush1.bf16.msra.mxu0 0
      %2454 = vmatprep.subr.bf16.mxu0 0
      %2455 = vmatpush1.bf16.msra.mxu0 0
      %2456 = vmatprep.subr.bf16.mxu0 0
      %2457 = vmatpush1.bf16.msra.mxu0 0
      %2458 = vmatprep.subr.bf16.mxu0 0
      %2459 = vmatpush1.bf16.msra.mxu0 0
      %2460 = vmatprep.subr.bf16.mxu0 0
      %2461 = vmatpush1.bf16.msra.mxu0 %v2444
      %2462 = vmatprep.subr.bf16.mxu0 0
      %2463 = vmatpush2.bf16.msra.mxu0 0
      %2464 = vmatprep.subr.bf16.mxu0 0
      %2465 = vmatpush2.bf16.msra.mxu0 0
      %2466 = vmatprep.subr.bf16.mxu0 0
      %2467 = vmatpush2.bf16.msra.mxu0 0
      %2468 = vmatprep.subr.bf16.mxu0 0
      %2469 = vmatpush2.bf16.msra.mxu0 0
      %2470 = vmatprep.subr.bf16.mxu0 0
      %2471 = vmatpush2.bf16.msra.mxu0 0
      %2472 = vmatprep.subr.bf16.mxu0 0
      %2473 = vmatpush2.bf16.msra.mxu0 0
      %2474 = vmatprep.subr.bf16.mxu0 0
      %2475 = vmatpush2.bf16.msra.mxu0 0
      %2476 = vmatprep.subr.bf16.mxu0 0
      %2477 = vmatpush2.bf16.msra.mxu0 0
      %2478 = vmatprep.mubr.bf16.mxu0 0
      %2479 = vmatmul.mubr.bf16.gmra.mxu0 %v1270
      %v2480 = vpop.f32.mrf.mxu0
      %v2481 = vadd.f32 0.0, %v2480
      %v2482 = vpop.f32.mrf.mxu0
      %v2483 = vpop.f32.mrf.mxu0
      %v2484 = vadd.f32 0.0, %v2483
      %v2485 = vpop.f32.mrf.mxu0
      %2486 = vmatprep.mubr.bf16.mxu0 0
      %2487 = vmatmul.mubr.bf16.gmra.mxu0 %v1273
      %v2488 = vpop.f32.mrf.mxu0
      %v2489 = vadd.f32 0.0, %v2488
      %v2490 = vpop.f32.mrf.mxu0
      %v2491 = vpop.f32.mrf.mxu0
      %v2492 = vadd.f32 0.0, %v2491
      %v2493 = vpop.f32.mrf.mxu0
      %2494 = vmatprep.mubr.bf16.mxu0 0
      %2495 = vmatmul.mubr.bf16.gmra.mxu0 %v1276
      %v2496 = vpop.f32.mrf.mxu0
      %v2497 = vadd.f32 0.0, %v2496
      %v2498 = vpop.f32.mrf.mxu0
      %v2499 = vpop.f32.mrf.mxu0
      %v2500 = vadd.f32 0.0, %v2499
      %v2501 = vpop.f32.mrf.mxu0
      %2502 = vmatprep.mubr.bf16.mxu0 0
      %2503 = vmatmul.mubr.bf16.gmra.mxu0 %v1279
      %v2504 = vpop.f32.mrf.mxu0
      %v2505 = vadd.f32 0.0, %v2504
      %v2506 = vpop.f32.mrf.mxu0
      %v2507 = vpop.f32.mrf.mxu0
      %v2508 = vadd.f32 0.0, %v2507
      %v2509 = vpop.f32.mrf.mxu0
      %2510 = vmatprep.mubr.bf16.mxu0 0
      %2511 = vmatmul.mubr.bf16.gmra.mxu0 %v1282
      %v2512 = vpop.f32.mrf.mxu0
      %v2513 = vadd.f32 0.0, %v2512
      %v2514 = vpop.f32.mrf.mxu0
      %v2515 = vpop.f32.mrf.mxu0
      %v2516 = vadd.f32 0.0, %v2515
      %v2517 = vpop.f32.mrf.mxu0
      %2518 = vmatprep.mubr.bf16.mxu0 0
      %2519 = vmatmul.mubr.bf16.gmra.mxu0 %v1285
      %v2520 = vpop.f32.mrf.mxu0
      %v2521 = vadd.f32 0.0, %v2520
      %v2522 = vpop.f32.mrf.mxu0
      %v2523 = vpop.f32.mrf.mxu0
      %v2524 = vadd.f32 0.0, %v2523
      %v2525 = vpop.f32.mrf.mxu0
      %2526 = vmatprep.mubr.bf16.mxu0 0
      %2527 = vmatmul.mubr.bf16.gmra.mxu0 %v1288
      %v2528 = vpop.f32.mrf.mxu0
      %v2529 = vadd.f32 0.0, %v2528
      %v2530 = vpop.f32.mrf.mxu0
      %v2531 = vpop.f32.mrf.mxu0
      %v2532 = vadd.f32 0.0, %v2531
      %v2533 = vpop.f32.mrf.mxu0
      %2534 = vmatprep.mubr.bf16.mxu0 0
      %2535 = vmatmul.mubr.bf16.gmra.mxu0 %v2441
      %v2536 = vpop.f32.mrf.mxu0
      %v2537 = vadd.f32 0.0, %v2536
      %v2538 = vpop.f32.mrf.mxu0
      %v2539 = vpop.f32.mrf.mxu0
      %v2540 = vadd.f32 0.0, %v2539
      %v2541 = vpop.f32.mrf.mxu0
      %2542 = vdwg.mxu0
      %v2543 = vadd.f32 %v2417, %v2481
      %v2544 = vadd.f32 %v2418, %v2484
      %v2545 = vadd.f32 %v2419, %v2489
      %v2546 = vadd.f32 %v2420, %v2492
      %v2547 = vadd.f32 %v2421, %v2497
      %v2548 = vadd.f32 %v2422, %v2500
      %v2549 = vadd.f32 %v2423, %v2505
      %v2550 = vadd.f32 %v2424, %v2508
      %v2551 = vadd.f32 %v2425, %v2513
      %v2552 = vadd.f32 %v2426, %v2516
      %v2553 = vadd.f32 %v2427, %v2521
      %v2554 = vadd.f32 %v2428, %v2524
      %v2555 = vadd.f32 %v2429, %v2529
      %v2556 = vadd.f32 %v2430, %v2532
      %v2557 = vadd.f32 %v2431, %v2537
      %v2558 = vadd.f32 %v2432, %v2540
      %v2561 = vunpack.c.l.b16 %v1155
      %v2562 = vunpack.c.l.b16 %v1156
      %v2563 = vpack.c.b16 %v2562, %v2561
      %v2565 = vshll.u32 %v2563, 16
      %v2567 = vrot.slane %v2565, 1
      %v2568 = vsel %vm1806, %v2167, %v2567
      %v2569 = vshrl.u32 %v2563, 16
      %v2571 = vor.u32 %v2569, %v2567
      %v2573 = vsel %vm1872, %v2571, 0
      %s2574 = scalar_lea.vmem %s5, 28
      %v2575 = vld [vmem:[%s2574] sm:$0xf]
      %v2577 = vsel %vm1265, %v2568, 0
      %v2580 = vsel %vm1265, %v2573, 0
      %v2583 = vsel %vm1290, %v2575, 0
      %2585 = vmatprep.subr.bf16.mxu0 0
      %2586 = vmatpush1.bf16.msra.mxu0 0
      %2587 = vmatprep.subr.bf16.mxu0 0
      %2588 = vmatpush1.bf16.msra.mxu0 0
      %2589 = vmatprep.subr.bf16.mxu0 0
      %2590 = vmatpush1.bf16.msra.mxu0 0
      %2591 = vmatprep.subr.bf16.mxu0 0
      %2592 = vmatpush1.bf16.msra.mxu0 0
      %2593 = vmatprep.subr.bf16.mxu0 0
      %2594 = vmatpush1.bf16.msra.mxu0 0
      %2595 = vmatprep.subr.bf16.mxu0 0
      %2596 = vmatpush1.bf16.msra.mxu0 0
      %2597 = vmatprep.subr.bf16.mxu0 0
      %2598 = vmatpush1.bf16.msra.mxu0 0
      %2599 = vmatprep.subr.bf16.mxu0 0
      %2600 = vmatpush1.bf16.msra.mxu0 %v2583
      %2601 = vmatprep.subr.bf16.mxu0 0
      %2602 = vmatpush2.bf16.msra.mxu0 0
      %2603 = vmatprep.subr.bf16.mxu0 0
      %2604 = vmatpush2.bf16.msra.mxu0 0
      %2605 = vmatprep.subr.bf16.mxu0 0
      %2606 = vmatpush2.bf16.msra.mxu0 0
      %2607 = vmatprep.subr.bf16.mxu0 0
      %2608 = vmatpush2.bf16.msra.mxu0 0
      %2609 = vmatprep.subr.bf16.mxu0 0
      %2610 = vmatpush2.bf16.msra.mxu0 0
      %2611 = vmatprep.subr.bf16.mxu0 0
      %2612 = vmatpush2.bf16.msra.mxu0 0
      %2613 = vmatprep.subr.bf16.mxu0 0
      %2614 = vmatpush2.bf16.msra.mxu0 0
      %2615 = vmatprep.subr.bf16.mxu0 0
      %2616 = vmatpush2.bf16.msra.mxu0 0
      %2617 = vmatprep.mubr.bf16.mxu0 0
      %2618 = vmatmul.mubr.bf16.gmra.mxu0 %v1883
      %v2619 = vpop.f32.mrf.mxu0
      %v2620 = vadd.f32 0.0, %v2619
      %v2621 = vpop.f32.mrf.mxu0
      %v2622 = vpop.f32.mrf.mxu0
      %v2623 = vadd.f32 0.0, %v2622
      %v2624 = vpop.f32.mrf.mxu0
      %2625 = vmatprep.mubr.bf16.mxu0 0
      %2626 = vmatmul.mubr.bf16.gmra.mxu0 %v1886
      %v2627 = vpop.f32.mrf.mxu0
      %v2628 = vadd.f32 0.0, %v2627
      %v2629 = vpop.f32.mrf.mxu0
      %v2630 = vpop.f32.mrf.mxu0
      %v2631 = vadd.f32 0.0, %v2630
      %v2632 = vpop.f32.mrf.mxu0
      %2633 = vmatprep.mubr.bf16.mxu0 0
      %2634 = vmatmul.mubr.bf16.gmra.mxu0 %v1889
      %v2635 = vpop.f32.mrf.mxu0
      %v2636 = vadd.f32 0.0, %v2635
      %v2637 = vpop.f32.mrf.mxu0
      %v2638 = vpop.f32.mrf.mxu0
      %v2639 = vadd.f32 0.0, %v2638
      %v2640 = vpop.f32.mrf.mxu0
      %2641 = vmatprep.mubr.bf16.mxu0 0
      %2642 = vmatmul.mubr.bf16.gmra.mxu0 %v1892
      %v2643 = vpop.f32.mrf.mxu0
      %v2644 = vadd.f32 0.0, %v2643
      %v2645 = vpop.f32.mrf.mxu0
      %v2646 = vpop.f32.mrf.mxu0
      %v2647 = vadd.f32 0.0, %v2646
      %v2648 = vpop.f32.mrf.mxu0
      %2649 = vmatprep.mubr.bf16.mxu0 0
      %2650 = vmatmul.mubr.bf16.gmra.mxu0 %v1895
      %v2651 = vpop.f32.mrf.mxu0
      %v2652 = vadd.f32 0.0, %v2651
      %v2653 = vpop.f32.mrf.mxu0
      %v2654 = vpop.f32.mrf.mxu0
      %v2655 = vadd.f32 0.0, %v2654
      %v2656 = vpop.f32.mrf.mxu0
      %2657 = vmatprep.mubr.bf16.mxu0 0
      %2658 = vmatmul.mubr.bf16.gmra.mxu0 %v2173
      %v2659 = vpop.f32.mrf.mxu0
      %v2660 = vadd.f32 0.0, %v2659
      %v2661 = vpop.f32.mrf.mxu0
      %v2662 = vpop.f32.mrf.mxu0
      %v2663 = vadd.f32 0.0, %v2662
      %v2664 = vpop.f32.mrf.mxu0
      %2665 = vmatprep.mubr.bf16.mxu0 0
      %2666 = vmatmul.mubr.bf16.gmra.mxu0 %v2577
      %v2667 = vpop.f32.mrf.mxu0
      %v2668 = vadd.f32 0.0, %v2667
      %v2669 = vpop.f32.mrf.mxu0
      %v2670 = vpop.f32.mrf.mxu0
      %v2671 = vadd.f32 0.0, %v2670
      %v2672 = vpop.f32.mrf.mxu0
      %2673 = vmatprep.mubr.bf16.mxu0 0
      %2674 = vmatmul.mubr.bf16.gmra.mxu0 %v2580
      %v2675 = vpop.f32.mrf.mxu0
      %v2676 = vadd.f32 0.0, %v2675
      %v2677 = vpop.f32.mrf.mxu0
      %v2678 = vpop.f32.mrf.mxu0
      %v2679 = vadd.f32 0.0, %v2678
      %v2680 = vpop.f32.mrf.mxu0
      %2681 = vdwg.mxu0
      %v2682 = vadd.f32 %v2543, %v2620
      %v2683 = vadd.f32 %v2544, %v2623
      %v2684 = vadd.f32 %v2545, %v2628
      %v2685 = vadd.f32 %v2546, %v2631
      %v2686 = vadd.f32 %v2547, %v2636
      %v2687 = vadd.f32 %v2548, %v2639
      %v2688 = vadd.f32 %v2549, %v2644
      %v2689 = vadd.f32 %v2550, %v2647
      %v2690 = vadd.f32 %v2551, %v2652
      %v2691 = vadd.f32 %v2552, %v2655
      %v2692 = vadd.f32 %v2553, %v2660
      %v2693 = vadd.f32 %v2554, %v2663
      %v2694 = vadd.f32 %v2555, %v2668
      %v2695 = vadd.f32 %v2556, %v2671
      %v2696 = vadd.f32 %v2557, %v2676
      %v2697 = vadd.f32 %v2558, %v2679
      %v2698 = vmax.f32 %v2682, 0.0
      %v2699 = vmax.f32 %v2683, 0.0
      %v2700 = vmax.f32 %v2684, 0.0
      %v2701 = vmax.f32 %v2685, 0.0
      %v2702 = vmax.f32 %v2686, 0.0
      %v2703 = vmax.f32 %v2687, 0.0
      %v2704 = vmax.f32 %v2688, 0.0
      %v2705 = vmax.f32 %v2689, 0.0
      %v2706 = vmax.f32 %v2690, 0.0
      %v2707 = vmax.f32 %v2691, 0.0
      %v2708 = vmax.f32 %v2692, 0.0
      %v2709 = vmax.f32 %v2693, 0.0
      %v2710 = vmax.f32 %v2694, 0.0
      %v2711 = vmax.f32 %v2695, 0.0
      %v2712 = vmax.f32 %v2696, 0.0
      %v2713 = vmax.f32 %v2697, 0.0
      %vm2714 = vcmask 261120
      %2715 = vst.msk [vmem:[%s273] sm:$0xff] %vm2714, %v2698
      %2716 = vst.msk [vmem:[%s273 + $0x8] sm:$0xff] %vm2714, %v2699
      %2717 = vst.msk [vmem:[%s273 + $0x10] sm:$0xff] %vm2714, %v2700
      %2718 = vst.msk [vmem:[%s273 + $0x18] sm:$0xff] %vm2714, %v2701
      %2719 = vst.msk [vmem:[%s273 + $0x20] sm:$0xff] %vm2714, %v2702
      %2720 = vst.msk [vmem:[%s273 + $0x28] sm:$0xff] %vm2714, %v2703
      %2721 = vst.msk [vmem:[%s273 + $0x30] sm:$0xff] %vm2714, %v2704
      %2722 = vst.msk [vmem:[%s273 + $0x38] sm:$0xff] %vm2714, %v2705
      %2723 = vst.msk [vmem:[%s273 + $0x40] sm:$0xff] %vm2714, %v2706
      %2724 = vst.msk [vmem:[%s273 + $0x48] sm:$0xff] %vm2714, %v2707
      %2725 = vst.msk [vmem:[%s273 + $0x50] sm:$0xff] %vm2714, %v2708
      %2726 = vst.msk [vmem:[%s273 + $0x58] sm:$0xff] %vm2714, %v2709
      %2727 = vst.msk [vmem:[%s273 + $0x60] sm:$0xff] %vm2714, %v2710
      %2728 = vst.msk [vmem:[%s273 + $0x68] sm:$0xff] %vm2714, %v2711
      %2729 = vst.msk [vmem:[%s273 + $0x70] sm:$0xff] %vm2714, %v2712
      %2730 = vst.msk [vmem:[%s273 + $0x78] sm:$0xff] %vm2714, %v2713
      %s2731 = smul.u32 16, %s22
      %p2732 = scmp.lt.s32.totalorder %s21, 1
      %s2733 = scalar_select %p2732, %s21, 1
      %p2734 = scmp.lt.s32.totalorder %s2731, 31
      %s2735 = scalar_select %p2734, %s2731, 31
      %s2736 = smul.addr %s2733, 32
      %s2737 = sadd.s32 %s2735, %s2736
      %s2738 = smul.addr %s2737, 8
      %s2739 = scalar_lea.vmem %s6, %s2738
      // Predicated region
      $region49: #{tpu_custom_call.1} parent=43 // pred_check
        %p2740 = pneg %p180
      $region50: #{tpu_custom_call.1} parent=43 // pred_check_branch
        %2742 = sbr.rel (%p2740) target = $region52
      $region51: #{tpu_custom_call.1} parent=43 // pred_region
        %s2743 = smul.u32 16, %s22
      $region52: #{tpu_custom_call.1} parent=43 // pred_fallthru
        _
    $region44: #{tpu_custom_call.1} parent=5 // pred_fallthru
      _
    %p2744 = scmp.le.s32.totalorder 2, %s12
    // Predicated region
    $region53: #{tpu_custom_call.1} parent=5 // pred_check
      %p2745 = pneg %p2744
    $region54: #{tpu_custom_call.1} parent=5 // pred_check_branch
      %2747 = sbr.rel (%p2745) target = $region56
    $region55: #{tpu_custom_call.1} parent=5 // pred_region
      %s2748 = ssub.s32 %s12, 2
      // Predicated region
      $region57: #{tpu_custom_call.1} parent=55 // pred_check
        %p2749 = pneg %p186
      $region58: #{tpu_custom_call.1} parent=55 // pred_check_branch
        %2751 = sbr.rel (%p2749) target = $region60
      $region59: #{tpu_custom_call.1} parent=55 // pred_region
        %s2752 = smul.u32 16, %s24
        %p2753 = scmp.lt.s32.totalorder %s23, 1
        %s2754 = scalar_select %p2753, %s23, 1
        %p2755 = scmp.lt.s32.totalorder %s2752, 31
        %s2756 = scalar_select %p2755, %s2752, 31
        %s2757 = smul.addr %s2754, 32
        %s2758 = sadd.s32 %s2756, %s2757
        %s2759 = smul.addr %s2758, 8
        %s2760 = scalar_lea.vmem %s6, %s2759
      $region60: #{tpu_custom_call.1} parent=55 // pred_fallthru
        _
    $region56: #{tpu_custom_call.1} parent=5 // pred_fallthru
      _
  $region6: #{tpu_custom_call.1} parent=0 // loop_footer
    %s16 = sadd.s32 1, %s12
  $region7: #{tpu_custom_call.1} parent=0 // loop_footer_branch
    %11 = sbr.rel target = $region3
  $region8: #{tpu_custom_call.1} parent=0 // loop_exit
    _

</llo_original>
